<compile_context>
chip_gen: v7x
topology: tpu7x:2x2x1
jax: 0.10.0
libtpu: 0.0.40
codegen_flags: <defaults>
</compile_context>

<pallas_src>
import math
import functools

import jax
import jax.numpy as jnp
from jax.experimental import pallas as pl
from jax.experimental.pallas import tpu as pltpu


def _round_up(x, m):
    return (x + m - 1) // m * m


# -----------------------------------------------------------------------------
# In-kernel helpers
# -----------------------------------------------------------------------------
def _lane_dense_slab(s):
    """(TB, R, L) -> (R, TB*L) with slab[i, b*L + j] = s[b, i, j].

    One XLU relayout + an unmasked full-width store downstream, instead of TB
    masked (<=L-lane) stores with lane rotates.
    """
    tb, r, l = s.shape
    return jnp.transpose(s, (1, 0, 2)).reshape(r, tb * l)


# -----------------------------------------------------------------------------
# Kernels: each grid step handles TB batch elements of the (BN, L, D) input and
# writes one lane-dense (L, TB*L) output slab (batch b occupies lanes
# [b*L, (b+1)*L)).  TB*L is always a multiple of 128.
# -----------------------------------------------------------------------------
def _cosine_kernel(x_ref, o_ref):
    tb, L, D = x_ref.shape
    x = x_ref[...].astype(jnp.float32)                                # (TB, L, D)
    # Pre-normalize rows: (x_l/a_l).(x_m/a_m) == (x_l.x_m)/(a_l a_m).  Divide
    # only the (TB, L, 1) tensor; multiply the big tensor by the reciprocal.
    norm = jnp.sqrt(jnp.sum(x * x, axis=2, keepdims=True)) + 1e-07    # (TB, L, 1)
    xn = x * (1.0 / norm)
    s = jnp.einsum("bld,bmd->blm", xn, xn,
                   preferred_element_type=jnp.float32)                # (TB, L, L)
    o_ref[0, :, :] = _lane_dense_slab(s).astype(o_ref.dtype)


def _dot_kernel(x_ref, o_ref):
    tb, L, D = x_ref.shape
    x = x_ref[...].astype(jnp.float32)                                # (TB, L, D)
    inv_sqrt_d = 1.0 / math.sqrt(D)
    if D < L:
        # Cheaper to scale one einsum operand (TB*L*D muls) than s (TB*L*L).
        s = jnp.einsum("bld,bmd->blm", x * inv_sqrt_d, x,
                       preferred_element_type=jnp.float32)
    else:
        s = jnp.einsum("bld,bmd->blm", x, x,
                       preferred_element_type=jnp.float32) * inv_sqrt_d
    s_max = jnp.max(s, axis=-1, keepdims=True)
    e = jnp.exp(s - s_max)                                            # EUP
    denom = jnp.sum(e, axis=-1, keepdims=True)                        # (TB, L, 1)
    p = e * (1.0 / denom)                                             # divide small, mul big
    o_ref[0, :, :] = _lane_dense_slab(p).astype(o_ref.dtype)


def _bilinear_kernel(x_ref, fc_ref, o_ref):
    tb, L, D = x_ref.shape
    x = x_ref[...].astype(jnp.float32)                                # (TB, L, D)
    fc = fc_ref[...].astype(jnp.float32)                              # (D, D)
    # One fused (TB*L, D) @ (D, D) matmul instead of TB tiny matmuls.
    xf = jnp.dot(x.reshape(tb * L, D), fc,
                 preferred_element_type=jnp.float32).reshape(tb, L, D)
    s = jnp.einsum("bld,bmd->blm", xf, x,
                   preferred_element_type=jnp.float32)                # (TB, L, L)
    o_ref[0, :, :] = _lane_dense_slab(s).astype(o_ref.dtype)


def _perceptron_kernel(x_ref, fc1_ref, fc2_ref, att_ref, o_ref, *, i_chunk):
    tb, L, D = x_ref.shape
    fc1 = fc1_ref[...].astype(jnp.float32)                            # (D, D)
    fc2 = fc2_ref[...].astype(jnp.float32)                            # (D, D)
    att4 = att_ref[...].astype(jnp.float32).reshape(1, 1, 1, D)       # (1,1,1,D)
    x = x_ref[...].astype(jnp.float32)                                # (TB, L, D)
    # Fused parameter matmul across the whole tile (needed for every chunk).
    x1 = jnp.dot(x.reshape(tb * L, D), fc1,
                 preferred_element_type=jnp.float32).reshape(tb, L, D)

    # W[b, i, j] = sum_d tanh(x1[b, j, d] + y1[b, i, d]) * att[d]
    # The i axis is chunked so the live tanh intermediate stays (TB, Ci, L, D);
    # the FC2 matmul for the chunk is recomputed from a ref slice (total MXU
    # work is unchanged and y1 never materializes in full).
    # TODO(synk): the D-contraction stays on VPU+XLU (multiply + lane reduce);
    # an MXU matvec variant needs a (TB*Ci*L, D) relayout reshape.
    def chunk(i0):
        xc = x_ref[:, pl.ds(i0, i_chunk), :].astype(jnp.float32)      # (TB, Ci, D)
        y_c = jnp.dot(xc.reshape(tb * i_chunk, D), fc2,
                      preferred_element_type=jnp.float32).reshape(tb, i_chunk, D)
        t = jnp.tanh(x1[:, None, :, :] + y_c[:, :, None, :])          # (TB, Ci, L, D)
        w = jnp.sum(t * att4, axis=-1)                                # (TB, Ci, L)
        slab = _lane_dense_slab(w).astype(o_ref.dtype)                # (Ci, TB*L)
        o_ref[0, pl.ds(i0, i_chunk), :] = slab

    n_chunks = L // i_chunk
    if n_chunks == 1:
        chunk(0)
    else:
        # lax.fori_loop (not a static Python loop) so the chunk's live range is
        # actually bounded and chunks cannot all be kept live simultaneously.
        def body(c, carry):
            chunk(pl.multiple_of(c * i_chunk, i_chunk))
            return carry
        jax.lax.fori_loop(0, n_chunks, body, 0)


# -----------------------------------------------------------------------------
# Hardware query + tile-size selection
# -----------------------------------------------------------------------------
def _tpu_resources():
    """(physical VMEM bytes per TensorCore, TensorCores per chip), safe fallbacks."""
    vmem_bytes = None
    num_cores = 1
    try:
        info = pltpu.get_tpu_info()
        v = int(getattr(info, "vmem_capacity_bytes", 0) or 0)
        vmem_bytes = v if v > 0 else None
    except Exception:
        vmem_bytes = None
    kind = ""
    try:
        kind = jax.devices()[0].device_kind.lower()
    except Exception:
        pass
    if "v7" in kind:
        num_cores = 2                       # 2 TCs/chip -> keep >=2 grid steps
        if vmem_bytes is None:
            vmem_bytes = 64 << 20           # v7x: 64 MiB per TC
    elif ("v5" in kind) or ("v6" in kind):
        if vmem_bytes is None:
            vmem_bytes = 128 << 20          # v5e / v6e: 128 MiB
    if vmem_bytes is None:
        vmem_bytes = 64 << 20               # conservative across current parts
    return vmem_bytes, num_cores


def _per_elem_vmem_bytes(L, D, mode):
    """Rough f32 VMEM bytes per batch element per grid step, lane/sublane padded."""
    f32 = 4
    Dp = max(_round_up(D, 128), 128)    # D sits on the lane axis of (.., L, D) values
    Lp = _round_up(L, 8)                # L on the sublane axis
    Ll = max(_round_up(L, 128), 128)    # L on the lane axis of (.., L, L) values
    x_buf = 2 * Lp * Dp * f32           # double-buffered input block
    o_buf = 2 * Lp * L * f32            # double-buffered output slab (TB*L lanes total)
    if mode == "cosine":
        interm = (2 * Lp * Dp + 2 * Lp * Ll) * f32          # x, xn, s, relayout copy
    elif mode == "dot":
        interm = (1 * Lp * Dp + 3 * Lp * Ll) * f32          # x, s, e, relayout copy
    elif mode == "bi-linear":
        interm = (2 * Lp * Dp + 2 * Lp * Ll) * f32          # x, x@FC, s, relayout copy
    else:  # perceptron: x, x@FC1, per-chunk y, >= min(L,8)-row tanh chunk, w + relayout
        ci = min(L, 8)
        interm = (3 * Lp * Dp + ci * L * Dp + 2 * Lp * Ll) * f32
    return x_buf + o_buf + interm


def _choose_tiling(BN, L, D, mode, budget_bytes, num_cores):
    """Pick (TB, nT).  TB*L is a multiple of 128 (lane-dense output, hard floor),
    TB fits the VMEM budget, and on 2-TC parts the grid keeps >= num_cores steps
    unless that would push TB*L below 128."""
    q = 128 // math.gcd(128, L)                          # TB quantum: (TB*L) % 128 == 0
    per_elem = max(1, _per_elem_vmem_bytes(L, D, mode))
    tb = max(q, (budget_bytes // per_elem) // q * q)     # hard 128-lane floor
    BN_q = _round_up(BN, q)
    tb = min(tb, BN_q)
    if num_cores > 1:                                    # v7x: a step per TensorCore
        tb = min(tb, max(q, (BN_q // num_cores) // q * q))
    nT = -(-BN_q // tb)
    tb = _round_up(-(-BN_q // nT), q)                    # balance: minimize padding
    nT = -(-BN_q // tb)
    return int(tb), int(nT)


def _choose_i_chunk(L, D, tb, budget_bytes):
    """Largest divisor of L whose (TB, Ci, L, D) f32 tanh chunk fits the budget."""
    Dp = max(_round_up(D, 128), 128)
    for ci in range(L, 0, -1):
        if L % ci == 0 and tb * ci * L * Dp * 4 <= budget_bytes:
            return ci
    return 1


# -----------------------------------------------------------------------------
# Wrapper
# -----------------------------------------------------------------------------
def similarity_forward(x, mode, params):
    """x: (B, N, L, D) float32 -> (B, N, L, L), matching torch Similarity.forward."""
    B, N, L, D = x.shape
    BN = B * N
    xr = x.reshape(BN, L, D)

    vmem_bytes, num_cores = _tpu_resources()
    # <= 3/4 of physical VMEM: <= 48 MiB on v7x (64 MiB), <= 96 MiB on v5e/v6e (128 MiB).
    vmem_limit = int(max(32 << 20, min(vmem_bytes * 3 // 4, 96 << 20)))
    TB, nT = _choose_tiling(BN, L, D, mode, vmem_limit // 2, num_cores)
    BN_pad = TB * nT
    if BN_pad != BN:
        xr = jnp.concatenate(
            [xr, jnp.zeros((BN_pad - BN, L, D), xr.dtype)], axis=0)

    x_spec = pl.BlockSpec((TB, L, D), lambda i: (i, 0, 0))
    # Lane-dense output slab: TB*L is a multiple of 128 -> unmasked VMEM stores
    # and a dense HBM writeback block.
    o_spec = pl.BlockSpec((1, L, TB * L), lambda i: (i, 0, 0))
    full_dd = pl.BlockSpec((D, D), lambda i: (0, 0))
    full_1d = pl.BlockSpec((1, D), lambda i: (0, 0))
    out_shape = jax.ShapeDtypeStruct((nT, L, TB * L), jnp.float32)
    cparams = pltpu.CompilerParams(
        dimension_semantics=("parallel",),
        vmem_limit_bytes=vmem_limit)

    if mode == "cosine":
        sim = pl.pallas_call(
            _cosine_kernel, out_shape=out_shape, grid=(nT,),
            in_specs=[x_spec], out_specs=o_spec, compiler_params=cparams)(xr)
    elif mode == "dot":
        sim = pl.pallas_call(
            _dot_kernel, out_shape=out_shape, grid=(nT,),
            in_specs=[x_spec], out_specs=o_spec, compiler_params=cparams)(xr)
    elif mode == "bi-linear":
        sim = pl.pallas_call(
            _bilinear_kernel, out_shape=out_shape, grid=(nT,),
            in_specs=[x_spec, full_dd], out_specs=o_spec,
            compiler_params=cparams)(xr, params["FC"])
    elif mode == "perceptron":
        i_chunk = _choose_i_chunk(L, D, TB, vmem_limit // 4)
        kern = functools.partial(_perceptron_kernel, i_chunk=i_chunk)
        sim = pl.pallas_call(
            kern, out_shape=out_shape, grid=(nT,),
            in_specs=[x_spec, full_dd, full_dd, full_1d], out_specs=o_spec,
            compiler_params=cparams)(
                xr, params["FC1"], params["FC2"],
                params["att"].T)   # torch att is (D, 1); pass lane-major (1, D)
    else:
        raise Exception("Error")

    # Un-pack the lane-dense layout: sim[t, i, b*L + j] == W[t*TB + b, i, j].
    # TODO(synk): if a downstream consumer can take the (nT, L, TB*L) lane-dense
    # layout directly, skip this extra HBM read+write pass.
    sim = sim.reshape(nT, L, TB, L)
    sim = jnp.transpose(sim, (0, 2, 1, 3)).reshape(BN_pad, L, L)
    return sim[:BN].reshape(B, N, L, L)


# -----------------------------------------------------------------------------
# Pure-JAX reference (mirrors the torch code) for verification.
# -----------------------------------------------------------------------------
def _reference(x, mode, params):
    B, N, L, D = x.shape
    xr = x.reshape(B * N, L, D)
    if mode == "cosine":
        l2 = jnp.linalg.norm(xr, axis=2) + 1e-07
        m = l2[:, :, None] * l2[:, None, :]
        sim = jnp.einsum("bld,bmd->blm", xr, xr) / m
    elif mode == "dot":
        s = jnp.einsum("bld,bmd->blm", xr, xr) / math.sqrt(D)
        sim = jax.nn.softmax(s, axis=-1)
    elif mode == "bi-linear":
        sim = jnp.einsum("bld,de,bme->blm", xr, params["FC"], xr)
    elif mode == "perceptron":
        x1 = jnp.einsum("bld,de->ble", xr, params["FC1"])
        y1 = jnp.einsum("bld,de->ble", xr, params["FC2"])
        t = jnp.tanh(x1[:, None, :, :] + y1[:, :, None, :])
        sim = jnp.einsum("bijd,d->bij", t, params["att"][:, 0])
    return sim.reshape(B, N, L, L)


if __name__ == "__main__":
    B, N, L, D = 2, 4, 8, 32
    key = jax.random.PRNGKey(0)
    kx, k1, k2, k3 = jax.random.split(key, 4)

    x = jax.random.normal(kx, (B, N, L, D), dtype=jnp.float32)

    # Deterministic parameter init (kaiming_uniform_(a=sqrt(5)) on (D, D) gives
    # bound = 1/sqrt(D)).  NOTE: torch leaves `att` at zeros; we use a small
    # uniform so the perceptron path is numerically non-trivial.
    bound = 1.0 / math.sqrt(D)
    params = {
        "FC":  jax.random.uniform(k1, (D, D), jnp.float32, -bound, bound),
        "FC1": jax.random.uniform(k1, (D, D), jnp.float32, -bound, bound),
        "FC2": jax.random.uniform(k2, (D, D), jnp.float32, -bound, bound),
        "att": jax.random.uniform(k3, (D, 1), jnp.float32, -bound, bound),
    }

    ok = True
    for mode in ["cosine", "dot", "bi-linear", "perceptron"]:
        out = similarity_forward(x, mode, params)
        out = jax.block_until_ready(out)
        ref = _reference(x, mode, params)
        if out.shape != (B, N, L, L):
            ok = False
            print(f"shape mismatch for {mode}: {out.shape}")
        if not jnp.allclose(out, ref, atol=1e-4, rtol=1e-4):
            ok = False
            err = float(jnp.max(jnp.abs(out - ref)))
            print(f"value mismatch for {mode}: max abs err {err:.3e}")

    if ok:
        print("KERNEL_OK")
</pallas_src>

<mosaic_0001>
module attributes {stable_mosaic.version = 11 : i64} {
  func.func @_cosine_kernel(%arg0: i32, %arg1: memref<16x8x32xf32, #tpu.memory_space<vmem>>, %arg2: memref<1x8x128xf32, #tpu.memory_space<vmem>>) attributes {dimension_semantics = [#tpu.dimension_semantics<parallel>], iteration_bounds = array<i64: 1>, scalar_prefetch = 0 : i64, scratch_operands = 0 : i64, tpu.core_type = #tpu.core_type<tc>, window_params = [{transform_indices = @transform_0, window_bounds = array<i64: 16, 8, 32>}, {transform_indices = @transform_1, window_bounds = array<i64: 1, 8, 128>}]} {
    %c0 = arith.constant 0 : index
    %c0_0 = arith.constant 0 : index
    %c0_1 = arith.constant 0 : index
    %0 = vector.load %arg1[%c0, %c0_0, %c0_1] : memref<16x8x32xf32, #tpu.memory_space<vmem>>, vector<16x8x32xf32>
    %1 = arith.mulf %0, %0 : vector<16x8x32xf32>
    %cst = arith.constant dense<0.000000e+00> : vector<16x8xf32>
    %2 = vector.multi_reduction <add>, %1, %cst [2] : vector<16x8x32xf32> to vector<16x8xf32>
    %3 = vector.shape_cast %2 : vector<16x8xf32> to vector<16x8x1xf32>
    %4 = math.sqrt %3 : vector<16x8x1xf32>
    %cst_2 = arith.constant 1.000000e-07 : f32
    %5 = vector.broadcast %cst_2 : f32 to vector<16x8x1xf32>
    %6 = arith.addf %4, %5 : vector<16x8x1xf32>
    %cst_3 = arith.constant 1.000000e+00 : f32
    %7 = vector.broadcast %cst_3 : f32 to vector<16x8x1xf32>
    %8 = arith.divf %7, %6 : vector<16x8x1xf32>
    %9 = vector.broadcast %8 : vector<16x8x1xf32> to vector<16x8x32xf32>
    %10 = arith.mulf %0, %9 : vector<16x8x32xf32>
    "tpu.trace_start"() <{level = 10 : i32, message = "bld,bmd->blm"}> : () -> ()
    %cst_4 = arith.constant dense<0.000000e+00> : vector<16x8x8xf32>
    %11 = tpu.matmul %10, %10, %cst_4 {dimension_numbers = #tpu.dot_dimension_numbers<[2], [2], [1], [1], [0, 0, 0, 1, 1, 1], [0], [0]>} : vector<16x8x32xf32>, vector<16x8x32xf32>, vector<16x8x8xf32> -> vector<16x8x8xf32>
    "tpu.trace_stop"() : () -> ()
    %12 = tpu.transpose %11, [1, 0, 2] : vector<16x8x8xf32> -> vector<8x16x8xf32>
    %13 = vector.shape_cast %12 : vector<8x16x8xf32> to vector<8x128xf32>
    %c0_5 = arith.constant 0 : index
    %c0_6 = arith.constant 0 : index
    %c0_7 = arith.constant 0 : index
    %14 = vector.load %arg2[%c0_5, %c0_6, %c0_7] : memref<1x8x128xf32, #tpu.memory_space<vmem>>, vector<1x8x128xf32>
    %15 = vector.shape_cast %14 : vector<1x8x128xf32> to vector<8x128xf32>
    %16 = vector.shape_cast %13 : vector<8x128xf32> to vector<1x8x128xf32>
    tpu.vector_store %arg2[%c0_5, %c0_6, %c0_7], %16 {strides = array<i32>} : memref<1x8x128xf32, #tpu.memory_space<vmem>>, vector<1x8x128xf32>,
    return
  }
  func.func @transform_0(%arg0: i32) -> (i32, i32, i32) {
    %c0_i32 = arith.constant 0 : i32
    %c0_i32_0 = arith.constant 0 : i32
    %c0_i32_1 = arith.constant 0 : i32
    return %arg0, %c0_i32, %c0_i32_0 : i32, i32, i32
  }
  func.func @transform_1(%arg0: i32) -> (i32, i32, i32) {
    %c0_i32 = arith.constant 0 : i32
    %c0_i32_0 = arith.constant 0 : i32
    %c0_i32_1 = arith.constant 0 : i32
    return %arg0, %c0_i32, %c0_i32_0 : i32, i32, i32
  }
}

</mosaic_0001>

<llo_original>
// kernel: tpu_custom_call.1
$region0: #{tpu_custom_call.1}
  #allocation0 [shape = 'u32[]', space=smem, size = 0x4, offset = 0x4, fixed_abs, tag = 'smem constant byte address 0x4 - core index']
  #allocation1 [shape = 'u32[144,128]{1,0:T(1,128)}', space=vmem, size = 0x12000, scoped, tag = 'internal scratch']
  %s0 = inlined_call_operand.hbm [shape: f32[16,8,32], index: 0, kind: input, shape index: {}]
  %s1 = inlined_call_operand.hbm [shape: f32[1,8,128], index: 1, kind: output, shape index: {}]
  %s2 = sld [smem:[#allocation0]]
  $region18: #{tpu_custom_call.1} parent=0
    _
  %s4 = ssub.s32 1, %s2
  %s5 = scalar_select 0, %s4, %s2
  $region1: #{tpu_custom_call.1} parent=0
    #allocation2 [shape = 'u8[65536]{0}', space=vmem, size = 0x10000, scoped, tag = 'input window, operand 0, single buffered']
    #allocation3 [shape = 's32[1]{0}', space=sflag, size = 0x4, scoped, tag = 'scoped memory for tpu_custom_call.1']
    #allocation4 [shape = 's32[1]{0}', space=sflag, size = 0x4, scoped, tag = 'scoped memory for tpu_custom_call.1']
    #allocation5 [shape = 'u8[4096]{0}', space=vmem, size = 0x1000, scoped, tag = 'output window, operand 0, single buffered']
    %6 = vsyncpa [#allocation3], 0
    %7 = vsyncpa [#allocation4], 0
    // Predicated region
    $region2: #{tpu_custom_call.1} parent=1 // pred_check
      _
    $region3: #{tpu_custom_call.1} parent=1 // pred_check_branch
      %9 = sbr.rel (0) target = $region5
    $region4: #{tpu_custom_call.1} parent=1 // pred_region
      %s11 = ssub.s32 2048, 2048
      %12 = vsyncadd [#allocation3], %s11
      %s13 = sshll.u32 [#allocation2], 4
      %s14 = int_to_ptr.vmem [resolvable:$true] %s13
      %19 = dma.hbm_to_vmem [thread:$0]  %s0, 2048, %s14, [#allocation3], 128, 128, 8
    $region5: #{tpu_custom_call.1} parent=1 // pred_fallthru
      _
    // Predicated region
    $region6: #{tpu_custom_call.1} parent=1 // pred_check
      _
    $region7: #{tpu_custom_call.1} parent=1 // pred_check_branch
      %21 = sbr.rel (0) target = $region9
    $region8: #{tpu_custom_call.1} parent=1 // pred_region
      %22 = dma.done [#allocation3], 2048
    $region9: #{tpu_custom_call.1} parent=1 // pred_fallthru
      _
    %v23 = vld [vmem:[#allocation2] sm:$0xff]
    %v24 = vld [vmem:[#allocation2 + $0x8] sm:$0xff]
    %v25 = vld [vmem:[#allocation2 + $0x10] sm:$0xff]
    %v26 = vld [vmem:[#allocation2 + $0x18] sm:$0xff]
    %v27 = vld [vmem:[#allocation2 + $0x20] sm:$0xff]
    %v28 = vld [vmem:[#allocation2 + $0x28] sm:$0xff]
    %v29 = vld [vmem:[#allocation2 + $0x30] sm:$0xff]
    %v30 = vld [vmem:[#allocation2 + $0x38] sm:$0xff]
    %v31 = vld [vmem:[#allocation2 + $0x40] sm:$0xff]
    %v32 = vld [vmem:[#allocation2 + $0x48] sm:$0xff]
    %v33 = vld [vmem:[#allocation2 + $0x50] sm:$0xff]
    %v34 = vld [vmem:[#allocation2 + $0x58] sm:$0xff]
    %v35 = vld [vmem:[#allocation2 + $0x60] sm:$0xff]
    %v36 = vld [vmem:[#allocation2 + $0x68] sm:$0xff]
    %v37 = vld [vmem:[#allocation2 + $0x70] sm:$0xff]
    %v38 = vld [vmem:[#allocation2 + $0x78] sm:$0xff]
    %v39 = vmul.f32 %v23, %v23
    %v40 = vmul.f32 %v24, %v24
    %v41 = vmul.f32 %v25, %v25
    %v42 = vmul.f32 %v26, %v26
    %v43 = vmul.f32 %v27, %v27
    %v44 = vmul.f32 %v28, %v28
    %v45 = vmul.f32 %v29, %v29
    %v46 = vmul.f32 %v30, %v30
    %v47 = vmul.f32 %v31, %v31
    %v48 = vmul.f32 %v32, %v32
    %v49 = vmul.f32 %v33, %v33
    %v50 = vmul.f32 %v34, %v34
    %v51 = vmul.f32 %v35, %v35
    %v52 = vmul.f32 %v36, %v36
    %v53 = vmul.f32 %v37, %v37
    %v54 = vmul.f32 %v38, %v38
    %vm55 = vcmask 261120
    %v56 = vsel %vm55, %v39, 0.0
    %57 = vadd.xlane.f32.xlu0 %v56
    %v58 = vpop.xlane.xlu0 %57
    %v59 = vsel %vm55, %v40, 0.0
    %60 = vadd.xlane.f32.xlu0 %v59
    %v61 = vpop.xlane.xlu0 %60
    %v62 = vsel %vm55, %v41, 0.0
    %63 = vadd.xlane.f32.xlu0 %v62
    %v64 = vpop.xlane.xlu0 %63
    %v65 = vsel %vm55, %v42, 0.0
    %66 = vadd.xlane.f32.xlu0 %v65
    %v67 = vpop.xlane.xlu0 %66
    %v68 = vsel %vm55, %v43, 0.0
    %69 = vadd.xlane.f32.xlu0 %v68
    %v70 = vpop.xlane.xlu0 %69
    %v71 = vsel %vm55, %v44, 0.0
    %72 = vadd.xlane.f32.xlu0 %v71
    %v73 = vpop.xlane.xlu0 %72
    %v74 = vsel %vm55, %v45, 0.0
    %75 = vadd.xlane.f32.xlu0 %v74
    %v76 = vpop.xlane.xlu0 %75
    %v77 = vsel %vm55, %v46, 0.0
    %78 = vadd.xlane.f32.xlu0 %v77
    %v79 = vpop.xlane.xlu0 %78
    %v80 = vsel %vm55, %v47, 0.0
    %81 = vadd.xlane.f32.xlu0 %v80
    %v82 = vpop.xlane.xlu0 %81
    %v83 = vsel %vm55, %v48, 0.0
    %84 = vadd.xlane.f32.xlu0 %v83
    %v85 = vpop.xlane.xlu0 %84
    %v86 = vsel %vm55, %v49, 0.0
    %87 = vadd.xlane.f32.xlu0 %v86
    %v88 = vpop.xlane.xlu0 %87
    %v89 = vsel %vm55, %v50, 0.0
    %90 = vadd.xlane.f32.xlu0 %v89
    %v91 = vpop.xlane.xlu0 %90
    %v92 = vsel %vm55, %v51, 0.0
    %93 = vadd.xlane.f32.xlu0 %v92
    %v94 = vpop.xlane.xlu0 %93
    %v95 = vsel %vm55, %v52, 0.0
    %96 = vadd.xlane.f32.xlu0 %v95
    %v97 = vpop.xlane.xlu0 %96
    %v98 = vsel %vm55, %v53, 0.0
    %99 = vadd.xlane.f32.xlu0 %v98
    %v100 = vpop.xlane.xlu0 %99
    %v101 = vsel %vm55, %v54, 0.0
    %102 = vadd.xlane.f32.xlu0 %v101
    %v103 = vpop.xlane.xlu0 %102
    %v104 = vrsqrt.pop %v58
    %v105 = vmul.f32 %v58, %v104
    %vm106 = vcmp.eq.f32.partialorder %v58, inf
    %v107 = vsel %vm106, %v58, %v105
    %vm108 = vcmp.eq.f32.partialorder %v58, 0.0
    %v109 = vand.u32 %v58, 2147483648
    %v110 = vsel %vm108, %v109, %v107
    %v111 = vrsqrt.pop %v61
    %v112 = vmul.f32 %v61, %v111
    %vm113 = vcmp.eq.f32.partialorder %v61, inf
    %v114 = vsel %vm113, %v61, %v112
    %vm115 = vcmp.eq.f32.partialorder %v61, 0.0
    %v116 = vand.u32 %v61, 2147483648
    %v117 = vsel %vm115, %v116, %v114
    %v118 = vrsqrt.pop %v64
    %v119 = vmul.f32 %v64, %v118
    %vm120 = vcmp.eq.f32.partialorder %v64, inf
    %v121 = vsel %vm120, %v64, %v119
    %vm122 = vcmp.eq.f32.partialorder %v64, 0.0
    %v123 = vand.u32 %v64, 2147483648
    %v124 = vsel %vm122, %v123, %v121
    %v125 = vrsqrt.pop %v67
    %v126 = vmul.f32 %v67, %v125
    %vm127 = vcmp.eq.f32.partialorder %v67, inf
    %v128 = vsel %vm127, %v67, %v126
    %vm129 = vcmp.eq.f32.partialorder %v67, 0.0
    %v130 = vand.u32 %v67, 2147483648
    %v131 = vsel %vm129, %v130, %v128
    %v132 = vrsqrt.pop %v70
    %v133 = vmul.f32 %v70, %v132
    %vm134 = vcmp.eq.f32.partialorder %v70, inf
    %v135 = vsel %vm134, %v70, %v133
    %vm136 = vcmp.eq.f32.partialorder %v70, 0.0
    %v137 = vand.u32 %v70, 2147483648
    %v138 = vsel %vm136, %v137, %v135
    %v139 = vrsqrt.pop %v73
    %v140 = vmul.f32 %v73, %v139
    %vm141 = vcmp.eq.f32.partialorder %v73, inf
    %v142 = vsel %vm141, %v73, %v140
    %vm143 = vcmp.eq.f32.partialorder %v73, 0.0
    %v144 = vand.u32 %v73, 2147483648
    %v145 = vsel %vm143, %v144, %v142
    %v146 = vrsqrt.pop %v76
    %v147 = vmul.f32 %v76, %v146
    %vm148 = vcmp.eq.f32.partialorder %v76, inf
    %v149 = vsel %vm148, %v76, %v147
    %vm150 = vcmp.eq.f32.partialorder %v76, 0.0
    %v151 = vand.u32 %v76, 2147483648
    %v152 = vsel %vm150, %v151, %v149
    %v153 = vrsqrt.pop %v79
    %v154 = vmul.f32 %v79, %v153
    %vm155 = vcmp.eq.f32.partialorder %v79, inf
    %v156 = vsel %vm155, %v79, %v154
    %vm157 = vcmp.eq.f32.partialorder %v79, 0.0
    %v158 = vand.u32 %v79, 2147483648
    %v159 = vsel %vm157, %v158, %v156
    %v160 = vrsqrt.pop %v82
    %v161 = vmul.f32 %v82, %v160
    %vm162 = vcmp.eq.f32.partialorder %v82, inf
    %v163 = vsel %vm162, %v82, %v161
    %vm164 = vcmp.eq.f32.partialorder %v82, 0.0
    %v165 = vand.u32 %v82, 2147483648
    %v166 = vsel %vm164, %v165, %v163
    %v167 = vrsqrt.pop %v85
    %v168 = vmul.f32 %v85, %v167
    %vm169 = vcmp.eq.f32.partialorder %v85, inf
    %v170 = vsel %vm169, %v85, %v168
    %vm171 = vcmp.eq.f32.partialorder %v85, 0.0
    %v172 = vand.u32 %v85, 2147483648
    %v173 = vsel %vm171, %v172, %v170
    %v174 = vrsqrt.pop %v88
    %v175 = vmul.f32 %v88, %v174
    %vm176 = vcmp.eq.f32.partialorder %v88, inf
    %v177 = vsel %vm176, %v88, %v175
    %vm178 = vcmp.eq.f32.partialorder %v88, 0.0
    %v179 = vand.u32 %v88, 2147483648
    %v180 = vsel %vm178, %v179, %v177
    %v181 = vrsqrt.pop %v91
    %v182 = vmul.f32 %v91, %v181
    %vm183 = vcmp.eq.f32.partialorder %v91, inf
    %v184 = vsel %vm183, %v91, %v182
    %vm185 = vcmp.eq.f32.partialorder %v91, 0.0
    %v186 = vand.u32 %v91, 2147483648
    %v187 = vsel %vm185, %v186, %v184
    %v188 = vrsqrt.pop %v94
    %v189 = vmul.f32 %v94, %v188
    %vm190 = vcmp.eq.f32.partialorder %v94, inf
    %v191 = vsel %vm190, %v94, %v189
    %vm192 = vcmp.eq.f32.partialorder %v94, 0.0
    %v193 = vand.u32 %v94, 2147483648
    %v194 = vsel %vm192, %v193, %v191
    %v195 = vrsqrt.pop %v97
    %v196 = vmul.f32 %v97, %v195
    %vm197 = vcmp.eq.f32.partialorder %v97, inf
    %v198 = vsel %vm197, %v97, %v196
    %vm199 = vcmp.eq.f32.partialorder %v97, 0.0
    %v200 = vand.u32 %v97, 2147483648
    %v201 = vsel %vm199, %v200, %v198
    %v202 = vrsqrt.pop %v100
    %v203 = vmul.f32 %v100, %v202
    %vm204 = vcmp.eq.f32.partialorder %v100, inf
    %v205 = vsel %vm204, %v100, %v203
    %vm206 = vcmp.eq.f32.partialorder %v100, 0.0
    %v207 = vand.u32 %v100, 2147483648
    %v208 = vsel %vm206, %v207, %v205
    %v209 = vrsqrt.pop %v103
    %v210 = vmul.f32 %v103, %v209
    %vm211 = vcmp.eq.f32.partialorder %v103, inf
    %v212 = vsel %vm211, %v103, %v210
    %vm213 = vcmp.eq.f32.partialorder %v103, 0.0
    %v214 = vand.u32 %v103, 2147483648
    %v215 = vsel %vm213, %v214, %v212
    %v216 = vadd.f32 %v110, 1e-07
    %v217 = vadd.f32 %v117, 1e-07
    %v218 = vadd.f32 %v124, 1e-07
    %v219 = vadd.f32 %v131, 1e-07
    %v220 = vadd.f32 %v138, 1e-07
    %v221 = vadd.f32 %v145, 1e-07
    %v222 = vadd.f32 %v152, 1e-07
    %v223 = vadd.f32 %v159, 1e-07
    %v224 = vadd.f32 %v166, 1e-07
    %v225 = vadd.f32 %v173, 1e-07
    %v226 = vadd.f32 %v180, 1e-07
    %v227 = vadd.f32 %v187, 1e-07
    %v228 = vadd.f32 %v194, 1e-07
    %v229 = vadd.f32 %v201, 1e-07
    %v230 = vadd.f32 %v208, 1e-07
    %v231 = vadd.f32 %v215, 1e-07
    %v232 = vrcp.pop %v216
    %v233 = vmul.f32 1.0, %v232
    %v234 = vrcp.pop %v217
    %v235 = vmul.f32 1.0, %v234
    %v236 = vrcp.pop %v218
    %v237 = vmul.f32 1.0, %v236
    %v238 = vrcp.pop %v219
    %v239 = vmul.f32 1.0, %v238
    %v240 = vrcp.pop %v220
    %v241 = vmul.f32 1.0, %v240
    %v242 = vrcp.pop %v221
    %v243 = vmul.f32 1.0, %v242
    %v244 = vrcp.pop %v222
    %v245 = vmul.f32 1.0, %v244
    %v246 = vrcp.pop %v223
    %v247 = vmul.f32 1.0, %v246
    %v248 = vrcp.pop %v224
    %v249 = vmul.f32 1.0, %v248
    %v250 = vrcp.pop %v225
    %v251 = vmul.f32 1.0, %v250
    %v252 = vrcp.pop %v226
    %v253 = vmul.f32 1.0, %v252
    %v254 = vrcp.pop %v227
    %v255 = vmul.f32 1.0, %v254
    %v256 = vrcp.pop %v228
    %v257 = vmul.f32 1.0, %v256
    %v258 = vrcp.pop %v229
    %v259 = vmul.f32 1.0, %v258
    %v260 = vrcp.pop %v230
    %v261 = vmul.f32 1.0, %v260
    %v262 = vrcp.pop %v231
    %v263 = vmul.f32 1.0, %v262
    %v264 = vmul.f32 %v23, %v233
    %v265 = vmul.f32 %v24, %v235
    %v266 = vmul.f32 %v25, %v237
    %v267 = vmul.f32 %v26, %v239
    %v268 = vmul.f32 %v27, %v241
    %v269 = vmul.f32 %v28, %v243
    %v270 = vmul.f32 %v29, %v245
    %v271 = vmul.f32 %v30, %v247
    %v272 = vmul.f32 %v31, %v249
    %v273 = vmul.f32 %v32, %v251
    %v274 = vmul.f32 %v33, %v253
    %v275 = vmul.f32 %v34, %v255
    %v276 = vmul.f32 %v35, %v257
    %v277 = vmul.f32 %v36, %v259
    %v278 = vmul.f32 %v37, %v261
    %v279 = vmul.f32 %v38, %v263
    %v281 = vsel %vm55, %v264, 0
    %283 = vmatprep.subr.mxu0 0.0
    %284 = vmatpush1.xpose.msra.mxu0 %v281
    %285 = vmatprep.subr.mxu0 0.0
    %286 = vmatpush1.xpose.msra.mxu0 0.0
    %287 = vmatprep.subr.mxu0 0.0
    %288 = vmatpush1.xpose.msra.mxu0 0.0
    %289 = vmatprep.subr.mxu0 0.0
    %290 = vmatpush1.xpose.msra.mxu0 0.0
    %291 = vmatprep.subr.mxu0 0.0
    %292 = vmatpush1.xpose.msra.mxu0 0.0
    %293 = vmatprep.subr.mxu0 0.0
    %294 = vmatpush1.xpose.msra.mxu0 0.0
    %295 = vmatprep.subr.mxu0 0.0
    %296 = vmatpush1.xpose.msra.mxu0 0.0
    %297 = vmatprep.subr.mxu0 0.0
    %298 = vmatpush1.xpose.msra.mxu0 0.0
    %299 = vmatprep.subr.mxu0 0.0
    %300 = vmatpush1.xpose.msra.mxu0 0.0
    %301 = vmatprep.subr.mxu0 0.0
    %302 = vmatpush1.xpose.msra.mxu0 0.0
    %303 = vmatprep.subr.mxu0 0.0
    %304 = vmatpush1.xpose.msra.mxu0 0.0
    %305 = vmatprep.subr.mxu0 0.0
    %306 = vmatpush1.xpose.msra.mxu0 0.0
    %307 = vmatprep.subr.mxu0 0.0
    %308 = vmatpush1.xpose.msra.mxu0 0.0
    %309 = vmatprep.subr.mxu0 0.0
    %310 = vmatpush1.xpose.msra.mxu0 0.0
    %311 = vmatprep.subr.mxu0 0.0
    %312 = vmatpush1.xpose.msra.mxu0 0.0
    %313 = vmatprep.subr.mxu0 0.0
    %314 = vmatpush1.xpose.msra.mxu0 0.0
    %315 = vmatprep.subr.mxu0 0.0
    %316 = vmatpush1.xpose.msra.mxu0 0.0
    %317 = vmatprep.subr.mxu0 0.0
    %318 = vmatpush1.xpose.msra.mxu0 0.0
    %319 = vmatprep.subr.mxu0 0.0
    %320 = vmatpush1.xpose.msra.mxu0 0.0
    %321 = vmatprep.subr.mxu0 0.0
    %322 = vmatpush1.xpose.msra.mxu0 0.0
    %323 = vmatprep.subr.mxu0 0.0
    %324 = vmatpush1.xpose.msra.mxu0 0.0
    %325 = vmatprep.subr.mxu0 0.0
    %326 = vmatpush1.xpose.msra.mxu0 0.0
    %327 = vmatprep.subr.mxu0 0.0
    %328 = vmatpush1.xpose.msra.mxu0 0.0
    %329 = vmatprep.subr.mxu0 0.0
    %330 = vmatpush1.xpose.msra.mxu0 0.0
    %331 = vmatprep.subr.mxu0 0.0
    %332 = vmatpush1.xpose.msra.mxu0 0.0
    %333 = vmatprep.subr.mxu0 0.0
    %334 = vmatpush1.xpose.msra.mxu0 0.0
    %335 = vmatprep.subr.mxu0 0.0
    %336 = vmatpush1.xpose.msra.mxu0 0.0
    %337 = vmatprep.subr.mxu0 0.0
    %338 = vmatpush1.xpose.msra.mxu0 0.0
    %339 = vmatprep.subr.mxu0 0.0
    %340 = vmatpush1.xpose.msra.mxu0 0.0
    %341 = vmatprep.subr.mxu0 0.0
    %342 = vmatpush1.xpose.msra.mxu0 0.0
    %343 = vmatprep.subr.mxu0 0.0
    %344 = vmatpush1.xpose.msra.mxu0 0.0
    %345 = vmatprep.subr.mxu0 0.0
    %346 = vmatpush1.xpose.msra.mxu0 0.0
    %347 = vmatprep.mubr.f32.mxu0 0.0
    %348 = vmatmul.mubr.f32.gmra.mrb[0].mxu0 %v281
    %v349 = vpop.f32.mrb[0].mxu0
    %v350 = vadd.f32 0.0, %v349
    %v351 = vpop.f32.mrb[0].mxu0
    %352 = vdwg.mxu0
    %v354 = vsel %vm55, %v265, 0
    %356 = vmatprep.subr.mxu0 0.0
    %357 = vmatpush1.xpose.msra.mxu0 %v354
    %358 = vmatprep.subr.mxu0 0.0
    %359 = vmatpush1.xpose.msra.mxu0 0.0
    %360 = vmatprep.subr.mxu0 0.0
    %361 = vmatpush1.xpose.msra.mxu0 0.0
    %362 = vmatprep.subr.mxu0 0.0
    %363 = vmatpush1.xpose.msra.mxu0 0.0
    %364 = vmatprep.subr.mxu0 0.0
    %365 = vmatpush1.xpose.msra.mxu0 0.0
    %366 = vmatprep.subr.mxu0 0.0
    %367 = vmatpush1.xpose.msra.mxu0 0.0
    %368 = vmatprep.subr.mxu0 0.0
    %369 = vmatpush1.xpose.msra.mxu0 0.0
    %370 = vmatprep.subr.mxu0 0.0
    %371 = vmatpush1.xpose.msra.mxu0 0.0
    %372 = vmatprep.subr.mxu0 0.0
    %373 = vmatpush1.xpose.msra.mxu0 0.0
    %374 = vmatprep.subr.mxu0 0.0
    %375 = vmatpush1.xpose.msra.mxu0 0.0
    %376 = vmatprep.subr.mxu0 0.0
    %377 = vmatpush1.xpose.msra.mxu0 0.0
    %378 = vmatprep.subr.mxu0 0.0
    %379 = vmatpush1.xpose.msra.mxu0 0.0
    %380 = vmatprep.subr.mxu0 0.0
    %381 = vmatpush1.xpose.msra.mxu0 0.0
    %382 = vmatprep.subr.mxu0 0.0
    %383 = vmatpush1.xpose.msra.mxu0 0.0
    %384 = vmatprep.subr.mxu0 0.0
    %385 = vmatpush1.xpose.msra.mxu0 0.0
    %386 = vmatprep.subr.mxu0 0.0
    %387 = vmatpush1.xpose.msra.mxu0 0.0
    %388 = vmatprep.subr.mxu0 0.0
    %389 = vmatpush1.xpose.msra.mxu0 0.0
    %390 = vmatprep.subr.mxu0 0.0
    %391 = vmatpush1.xpose.msra.mxu0 0.0
    %392 = vmatprep.subr.mxu0 0.0
    %393 = vmatpush1.xpose.msra.mxu0 0.0
    %394 = vmatprep.subr.mxu0 0.0
    %395 = vmatpush1.xpose.msra.mxu0 0.0
    %396 = vmatprep.subr.mxu0 0.0
    %397 = vmatpush1.xpose.msra.mxu0 0.0
    %398 = vmatprep.subr.mxu0 0.0
    %399 = vmatpush1.xpose.msra.mxu0 0.0
    %400 = vmatprep.subr.mxu0 0.0
    %401 = vmatpush1.xpose.msra.mxu0 0.0
    %402 = vmatprep.subr.mxu0 0.0
    %403 = vmatpush1.xpose.msra.mxu0 0.0
    %404 = vmatprep.subr.mxu0 0.0
    %405 = vmatpush1.xpose.msra.mxu0 0.0
    %406 = vmatprep.subr.mxu0 0.0
    %407 = vmatpush1.xpose.msra.mxu0 0.0
    %408 = vmatprep.subr.mxu0 0.0
    %409 = vmatpush1.xpose.msra.mxu0 0.0
    %410 = vmatprep.subr.mxu0 0.0
    %411 = vmatpush1.xpose.msra.mxu0 0.0
    %412 = vmatprep.subr.mxu0 0.0
    %413 = vmatpush1.xpose.msra.mxu0 0.0
    %414 = vmatprep.subr.mxu0 0.0
    %415 = vmatpush1.xpose.msra.mxu0 0.0
    %416 = vmatprep.subr.mxu0 0.0
    %417 = vmatpush1.xpose.msra.mxu0 0.0
    %418 = vmatprep.subr.mxu0 0.0
    %419 = vmatpush1.xpose.msra.mxu0 0.0
    %420 = vmatprep.mubr.f32.mxu0 0.0
    %421 = vmatmul.mubr.f32.gmra.mrb[0].mxu0 %v354
    %v422 = vpop.f32.mrb[0].mxu0
    %v423 = vadd.f32 0.0, %v422
    %v424 = vpop.f32.mrb[0].mxu0
    %425 = vdwg.mxu0
    %v427 = vsel %vm55, %v266, 0
    %429 = vmatprep.subr.mxu0 0.0
    %430 = vmatpush1.xpose.msra.mxu0 %v427
    %431 = vmatprep.subr.mxu0 0.0
    %432 = vmatpush1.xpose.msra.mxu0 0.0
    %433 = vmatprep.subr.mxu0 0.0
    %434 = vmatpush1.xpose.msra.mxu0 0.0
    %435 = vmatprep.subr.mxu0 0.0
    %436 = vmatpush1.xpose.msra.mxu0 0.0
    %437 = vmatprep.subr.mxu0 0.0
    %438 = vmatpush1.xpose.msra.mxu0 0.0
    %439 = vmatprep.subr.mxu0 0.0
    %440 = vmatpush1.xpose.msra.mxu0 0.0
    %441 = vmatprep.subr.mxu0 0.0
    %442 = vmatpush1.xpose.msra.mxu0 0.0
    %443 = vmatprep.subr.mxu0 0.0
    %444 = vmatpush1.xpose.msra.mxu0 0.0
    %445 = vmatprep.subr.mxu0 0.0
    %446 = vmatpush1.xpose.msra.mxu0 0.0
    %447 = vmatprep.subr.mxu0 0.0
    %448 = vmatpush1.xpose.msra.mxu0 0.0
    %449 = vmatprep.subr.mxu0 0.0
    %450 = vmatpush1.xpose.msra.mxu0 0.0
    %451 = vmatprep.subr.mxu0 0.0
    %452 = vmatpush1.xpose.msra.mxu0 0.0
    %453 = vmatprep.subr.mxu0 0.0
    %454 = vmatpush1.xpose.msra.mxu0 0.0
    %455 = vmatprep.subr.mxu0 0.0
    %456 = vmatpush1.xpose.msra.mxu0 0.0
    %457 = vmatprep.subr.mxu0 0.0
    %458 = vmatpush1.xpose.msra.mxu0 0.0
    %459 = vmatprep.subr.mxu0 0.0
    %460 = vmatpush1.xpose.msra.mxu0 0.0
    %461 = vmatprep.subr.mxu0 0.0
    %462 = vmatpush1.xpose.msra.mxu0 0.0
    %463 = vmatprep.subr.mxu0 0.0
    %464 = vmatpush1.xpose.msra.mxu0 0.0
    %465 = vmatprep.subr.mxu0 0.0
    %466 = vmatpush1.xpose.msra.mxu0 0.0
    %467 = vmatprep.subr.mxu0 0.0
    %468 = vmatpush1.xpose.msra.mxu0 0.0
    %469 = vmatprep.subr.mxu0 0.0
    %470 = vmatpush1.xpose.msra.mxu0 0.0
    %471 = vmatprep.subr.mxu0 0.0
    %472 = vmatpush1.xpose.msra.mxu0 0.0
    %473 = vmatprep.subr.mxu0 0.0
    %474 = vmatpush1.xpose.msra.mxu0 0.0
    %475 = vmatprep.subr.mxu0 0.0
    %476 = vmatpush1.xpose.msra.mxu0 0.0
    %477 = vmatprep.subr.mxu0 0.0
    %478 = vmatpush1.xpose.msra.mxu0 0.0
    %479 = vmatprep.subr.mxu0 0.0
    %480 = vmatpush1.xpose.msra.mxu0 0.0
    %481 = vmatprep.subr.mxu0 0.0
    %482 = vmatpush1.xpose.msra.mxu0 0.0
    %483 = vmatprep.subr.mxu0 0.0
    %484 = vmatpush1.xpose.msra.mxu0 0.0
    %485 = vmatprep.subr.mxu0 0.0
    %486 = vmatpush1.xpose.msra.mxu0 0.0
    %487 = vmatprep.subr.mxu0 0.0
    %488 = vmatpush1.xpose.msra.mxu0 0.0
    %489 = vmatprep.subr.mxu0 0.0
    %490 = vmatpush1.xpose.msra.mxu0 0.0
    %491 = vmatprep.subr.mxu0 0.0
    %492 = vmatpush1.xpose.msra.mxu0 0.0
    %493 = vmatprep.mubr.f32.mxu0 0.0
    %494 = vmatmul.mubr.f32.gmra.mrb[0].mxu0 %v427
    %v495 = vpop.f32.mrb[0].mxu0
    %v496 = vadd.f32 0.0, %v495
    %v497 = vpop.f32.mrb[0].mxu0
    %498 = vdwg.mxu0
    %v500 = vsel %vm55, %v267, 0
    %502 = vmatprep.subr.mxu0 0.0
    %503 = vmatpush1.xpose.msra.mxu0 %v500
    %504 = vmatprep.subr.mxu0 0.0
    %505 = vmatpush1.xpose.msra.mxu0 0.0
    %506 = vmatprep.subr.mxu0 0.0
    %507 = vmatpush1.xpose.msra.mxu0 0.0
    %508 = vmatprep.subr.mxu0 0.0
    %509 = vmatpush1.xpose.msra.mxu0 0.0
    %510 = vmatprep.subr.mxu0 0.0
    %511 = vmatpush1.xpose.msra.mxu0 0.0
    %512 = vmatprep.subr.mxu0 0.0
    %513 = vmatpush1.xpose.msra.mxu0 0.0
    %514 = vmatprep.subr.mxu0 0.0
    %515 = vmatpush1.xpose.msra.mxu0 0.0
    %516 = vmatprep.subr.mxu0 0.0
    %517 = vmatpush1.xpose.msra.mxu0 0.0
    %518 = vmatprep.subr.mxu0 0.0
    %519 = vmatpush1.xpose.msra.mxu0 0.0
    %520 = vmatprep.subr.mxu0 0.0
    %521 = vmatpush1.xpose.msra.mxu0 0.0
    %522 = vmatprep.subr.mxu0 0.0
    %523 = vmatpush1.xpose.msra.mxu0 0.0
    %524 = vmatprep.subr.mxu0 0.0
    %525 = vmatpush1.xpose.msra.mxu0 0.0
    %526 = vmatprep.subr.mxu0 0.0
    %527 = vmatpush1.xpose.msra.mxu0 0.0
    %528 = vmatprep.subr.mxu0 0.0
    %529 = vmatpush1.xpose.msra.mxu0 0.0
    %530 = vmatprep.subr.mxu0 0.0
    %531 = vmatpush1.xpose.msra.mxu0 0.0
    %532 = vmatprep.subr.mxu0 0.0
    %533 = vmatpush1.xpose.msra.mxu0 0.0
    %534 = vmatprep.subr.mxu0 0.0
    %535 = vmatpush1.xpose.msra.mxu0 0.0
    %536 = vmatprep.subr.mxu0 0.0
    %537 = vmatpush1.xpose.msra.mxu0 0.0
    %538 = vmatprep.subr.mxu0 0.0
    %539 = vmatpush1.xpose.msra.mxu0 0.0
    %540 = vmatprep.subr.mxu0 0.0
    %541 = vmatpush1.xpose.msra.mxu0 0.0
    %542 = vmatprep.subr.mxu0 0.0
    %543 = vmatpush1.xpose.msra.mxu0 0.0
    %544 = vmatprep.subr.mxu0 0.0
    %545 = vmatpush1.xpose.msra.mxu0 0.0
    %546 = vmatprep.subr.mxu0 0.0
    %547 = vmatpush1.xpose.msra.mxu0 0.0
    %548 = vmatprep.subr.mxu0 0.0
    %549 = vmatpush1.xpose.msra.mxu0 0.0
    %550 = vmatprep.subr.mxu0 0.0
    %551 = vmatpush1.xpose.msra.mxu0 0.0
    %552 = vmatprep.subr.mxu0 0.0
    %553 = vmatpush1.xpose.msra.mxu0 0.0
    %554 = vmatprep.subr.mxu0 0.0
    %555 = vmatpush1.xpose.msra.mxu0 0.0
    %556 = vmatprep.subr.mxu0 0.0
    %557 = vmatpush1.xpose.msra.mxu0 0.0
    %558 = vmatprep.subr.mxu0 0.0
    %559 = vmatpush1.xpose.msra.mxu0 0.0
    %560 = vmatprep.subr.mxu0 0.0
    %561 = vmatpush1.xpose.msra.mxu0 0.0
    %562 = vmatprep.subr.mxu0 0.0
    %563 = vmatpush1.xpose.msra.mxu0 0.0
    %564 = vmatprep.subr.mxu0 0.0
    %565 = vmatpush1.xpose.msra.mxu0 0.0
    %566 = vmatprep.mubr.f32.mxu0 0.0
    %567 = vmatmul.mubr.f32.gmra.mrb[0].mxu0 %v500
    %v568 = vpop.f32.mrb[0].mxu0
    %v569 = vadd.f32 0.0, %v568
    %v570 = vpop.f32.mrb[0].mxu0
    %571 = vdwg.mxu0
    %v573 = vsel %vm55, %v268, 0
    %575 = vmatprep.subr.mxu0 0.0
    %576 = vmatpush1.xpose.msra.mxu0 %v573
    %577 = vmatprep.subr.mxu0 0.0
    %578 = vmatpush1.xpose.msra.mxu0 0.0
    %579 = vmatprep.subr.mxu0 0.0
    %580 = vmatpush1.xpose.msra.mxu0 0.0
    %581 = vmatprep.subr.mxu0 0.0
    %582 = vmatpush1.xpose.msra.mxu0 0.0
    %583 = vmatprep.subr.mxu0 0.0
    %584 = vmatpush1.xpose.msra.mxu0 0.0
    %585 = vmatprep.subr.mxu0 0.0
    %586 = vmatpush1.xpose.msra.mxu0 0.0
    %587 = vmatprep.subr.mxu0 0.0
    %588 = vmatpush1.xpose.msra.mxu0 0.0
    %589 = vmatprep.subr.mxu0 0.0
    %590 = vmatpush1.xpose.msra.mxu0 0.0
    %591 = vmatprep.subr.mxu0 0.0
    %592 = vmatpush1.xpose.msra.mxu0 0.0
    %593 = vmatprep.subr.mxu0 0.0
    %594 = vmatpush1.xpose.msra.mxu0 0.0
    %595 = vmatprep.subr.mxu0 0.0
    %596 = vmatpush1.xpose.msra.mxu0 0.0
    %597 = vmatprep.subr.mxu0 0.0
    %598 = vmatpush1.xpose.msra.mxu0 0.0
    %599 = vmatprep.subr.mxu0 0.0
    %600 = vmatpush1.xpose.msra.mxu0 0.0
    %601 = vmatprep.subr.mxu0 0.0
    %602 = vmatpush1.xpose.msra.mxu0 0.0
    %603 = vmatprep.subr.mxu0 0.0
    %604 = vmatpush1.xpose.msra.mxu0 0.0
    %605 = vmatprep.subr.mxu0 0.0
    %606 = vmatpush1.xpose.msra.mxu0 0.0
    %607 = vmatprep.subr.mxu0 0.0
    %608 = vmatpush1.xpose.msra.mxu0 0.0
    %609 = vmatprep.subr.mxu0 0.0
    %610 = vmatpush1.xpose.msra.mxu0 0.0
    %611 = vmatprep.subr.mxu0 0.0
    %612 = vmatpush1.xpose.msra.mxu0 0.0
    %613 = vmatprep.subr.mxu0 0.0
    %614 = vmatpush1.xpose.msra.mxu0 0.0
    %615 = vmatprep.subr.mxu0 0.0
    %616 = vmatpush1.xpose.msra.mxu0 0.0
    %617 = vmatprep.subr.mxu0 0.0
    %618 = vmatpush1.xpose.msra.mxu0 0.0
    %619 = vmatprep.subr.mxu0 0.0
    %620 = vmatpush1.xpose.msra.mxu0 0.0
    %621 = vmatprep.subr.mxu0 0.0
    %622 = vmatpush1.xpose.msra.mxu0 0.0
    %623 = vmatprep.subr.mxu0 0.0
    %624 = vmatpush1.xpose.msra.mxu0 0.0
    %625 = vmatprep.subr.mxu0 0.0
    %626 = vmatpush1.xpose.msra.mxu0 0.0
    %627 = vmatprep.subr.mxu0 0.0
    %628 = vmatpush1.xpose.msra.mxu0 0.0
    %629 = vmatprep.subr.mxu0 0.0
    %630 = vmatpush1.xpose.msra.mxu0 0.0
    %631 = vmatprep.subr.mxu0 0.0
    %632 = vmatpush1.xpose.msra.mxu0 0.0
    %633 = vmatprep.subr.mxu0 0.0
    %634 = vmatpush1.xpose.msra.mxu0 0.0
    %635 = vmatprep.subr.mxu0 0.0
    %636 = vmatpush1.xpose.msra.mxu0 0.0
    %637 = vmatprep.subr.mxu0 0.0
    %638 = vmatpush1.xpose.msra.mxu0 0.0
    %639 = vmatprep.mubr.f32.mxu0 0.0
    %640 = vmatmul.mubr.f32.gmra.mrb[0].mxu0 %v573
    %v641 = vpop.f32.mrb[0].mxu0
    %v642 = vadd.f32 0.0, %v641
    %v643 = vpop.f32.mrb[0].mxu0
    %644 = vdwg.mxu0
    %v646 = vsel %vm55, %v269, 0
    %648 = vmatprep.subr.mxu0 0.0
    %649 = vmatpush1.xpose.msra.mxu0 %v646
    %650 = vmatprep.subr.mxu0 0.0
    %651 = vmatpush1.xpose.msra.mxu0 0.0
    %652 = vmatprep.subr.mxu0 0.0
    %653 = vmatpush1.xpose.msra.mxu0 0.0
    %654 = vmatprep.subr.mxu0 0.0
    %655 = vmatpush1.xpose.msra.mxu0 0.0
    %656 = vmatprep.subr.mxu0 0.0
    %657 = vmatpush1.xpose.msra.mxu0 0.0
    %658 = vmatprep.subr.mxu0 0.0
    %659 = vmatpush1.xpose.msra.mxu0 0.0
    %660 = vmatprep.subr.mxu0 0.0
    %661 = vmatpush1.xpose.msra.mxu0 0.0
    %662 = vmatprep.subr.mxu0 0.0
    %663 = vmatpush1.xpose.msra.mxu0 0.0
    %664 = vmatprep.subr.mxu0 0.0
    %665 = vmatpush1.xpose.msra.mxu0 0.0
    %666 = vmatprep.subr.mxu0 0.0
    %667 = vmatpush1.xpose.msra.mxu0 0.0
    %668 = vmatprep.subr.mxu0 0.0
    %669 = vmatpush1.xpose.msra.mxu0 0.0
    %670 = vmatprep.subr.mxu0 0.0
    %671 = vmatpush1.xpose.msra.mxu0 0.0
    %672 = vmatprep.subr.mxu0 0.0
    %673 = vmatpush1.xpose.msra.mxu0 0.0
    %674 = vmatprep.subr.mxu0 0.0
    %675 = vmatpush1.xpose.msra.mxu0 0.0
    %676 = vmatprep.subr.mxu0 0.0
    %677 = vmatpush1.xpose.msra.mxu0 0.0
    %678 = vmatprep.subr.mxu0 0.0
    %679 = vmatpush1.xpose.msra.mxu0 0.0
    %680 = vmatprep.subr.mxu0 0.0
    %681 = vmatpush1.xpose.msra.mxu0 0.0
    %682 = vmatprep.subr.mxu0 0.0
    %683 = vmatpush1.xpose.msra.mxu0 0.0
    %684 = vmatprep.subr.mxu0 0.0
    %685 = vmatpush1.xpose.msra.mxu0 0.0
    %686 = vmatprep.subr.mxu0 0.0
    %687 = vmatpush1.xpose.msra.mxu0 0.0
    %688 = vmatprep.subr.mxu0 0.0
    %689 = vmatpush1.xpose.msra.mxu0 0.0
    %690 = vmatprep.subr.mxu0 0.0
    %691 = vmatpush1.xpose.msra.mxu0 0.0
    %692 = vmatprep.subr.mxu0 0.0
    %693 = vmatpush1.xpose.msra.mxu0 0.0
    %694 = vmatprep.subr.mxu0 0.0
    %695 = vmatpush1.xpose.msra.mxu0 0.0
    %696 = vmatprep.subr.mxu0 0.0
    %697 = vmatpush1.xpose.msra.mxu0 0.0
    %698 = vmatprep.subr.mxu0 0.0
    %699 = vmatpush1.xpose.msra.mxu0 0.0
    %700 = vmatprep.subr.mxu0 0.0
    %701 = vmatpush1.xpose.msra.mxu0 0.0
    %702 = vmatprep.subr.mxu0 0.0
    %703 = vmatpush1.xpose.msra.mxu0 0.0
    %704 = vmatprep.subr.mxu0 0.0
    %705 = vmatpush1.xpose.msra.mxu0 0.0
    %706 = vmatprep.subr.mxu0 0.0
    %707 = vmatpush1.xpose.msra.mxu0 0.0
    %708 = vmatprep.subr.mxu0 0.0
    %709 = vmatpush1.xpose.msra.mxu0 0.0
    %710 = vmatprep.subr.mxu0 0.0
    %711 = vmatpush1.xpose.msra.mxu0 0.0
    %712 = vmatprep.mubr.f32.mxu0 0.0
    %713 = vmatmul.mubr.f32.gmra.mrb[0].mxu0 %v646
    %v714 = vpop.f32.mrb[0].mxu0
    %v715 = vadd.f32 0.0, %v714
    %v716 = vpop.f32.mrb[0].mxu0
    %717 = vdwg.mxu0
    %v719 = vsel %vm55, %v270, 0
    %721 = vmatprep.subr.mxu0 0.0
    %722 = vmatpush1.xpose.msra.mxu0 %v719
    %723 = vmatprep.subr.mxu0 0.0
    %724 = vmatpush1.xpose.msra.mxu0 0.0
    %725 = vmatprep.subr.mxu0 0.0
    %726 = vmatpush1.xpose.msra.mxu0 0.0
    %727 = vmatprep.subr.mxu0 0.0
    %728 = vmatpush1.xpose.msra.mxu0 0.0
    %729 = vmatprep.subr.mxu0 0.0
    %730 = vmatpush1.xpose.msra.mxu0 0.0
    %731 = vmatprep.subr.mxu0 0.0
    %732 = vmatpush1.xpose.msra.mxu0 0.0
    %733 = vmatprep.subr.mxu0 0.0
    %734 = vmatpush1.xpose.msra.mxu0 0.0
    %735 = vmatprep.subr.mxu0 0.0
    %736 = vmatpush1.xpose.msra.mxu0 0.0
    %737 = vmatprep.subr.mxu0 0.0
    %738 = vmatpush1.xpose.msra.mxu0 0.0
    %739 = vmatprep.subr.mxu0 0.0
    %740 = vmatpush1.xpose.msra.mxu0 0.0
    %741 = vmatprep.subr.mxu0 0.0
    %742 = vmatpush1.xpose.msra.mxu0 0.0
    %743 = vmatprep.subr.mxu0 0.0
    %744 = vmatpush1.xpose.msra.mxu0 0.0
    %745 = vmatprep.subr.mxu0 0.0
    %746 = vmatpush1.xpose.msra.mxu0 0.0
    %747 = vmatprep.subr.mxu0 0.0
    %748 = vmatpush1.xpose.msra.mxu0 0.0
    %749 = vmatprep.subr.mxu0 0.0
    %750 = vmatpush1.xpose.msra.mxu0 0.0
    %751 = vmatprep.subr.mxu0 0.0
    %752 = vmatpush1.xpose.msra.mxu0 0.0
    %753 = vmatprep.subr.mxu0 0.0
    %754 = vmatpush1.xpose.msra.mxu0 0.0
    %755 = vmatprep.subr.mxu0 0.0
    %756 = vmatpush1.xpose.msra.mxu0 0.0
    %757 = vmatprep.subr.mxu0 0.0
    %758 = vmatpush1.xpose.msra.mxu0 0.0
    %759 = vmatprep.subr.mxu0 0.0
    %760 = vmatpush1.xpose.msra.mxu0 0.0
    %761 = vmatprep.subr.mxu0 0.0
    %762 = vmatpush1.xpose.msra.mxu0 0.0
    %763 = vmatprep.subr.mxu0 0.0
    %764 = vmatpush1.xpose.msra.mxu0 0.0
    %765 = vmatprep.subr.mxu0 0.0
    %766 = vmatpush1.xpose.msra.mxu0 0.0
    %767 = vmatprep.subr.mxu0 0.0
    %768 = vmatpush1.xpose.msra.mxu0 0.0
    %769 = vmatprep.subr.mxu0 0.0
    %770 = vmatpush1.xpose.msra.mxu0 0.0
    %771 = vmatprep.subr.mxu0 0.0
    %772 = vmatpush1.xpose.msra.mxu0 0.0
    %773 = vmatprep.subr.mxu0 0.0
    %774 = vmatpush1.xpose.msra.mxu0 0.0
    %775 = vmatprep.subr.mxu0 0.0
    %776 = vmatpush1.xpose.msra.mxu0 0.0
    %777 = vmatprep.subr.mxu0 0.0
    %778 = vmatpush1.xpose.msra.mxu0 0.0
    %779 = vmatprep.subr.mxu0 0.0
    %780 = vmatpush1.xpose.msra.mxu0 0.0
    %781 = vmatprep.subr.mxu0 0.0
    %782 = vmatpush1.xpose.msra.mxu0 0.0
    %783 = vmatprep.subr.mxu0 0.0
    %784 = vmatpush1.xpose.msra.mxu0 0.0
    %785 = vmatprep.mubr.f32.mxu0 0.0
    %786 = vmatmul.mubr.f32.gmra.mrb[0].mxu0 %v719
    %v787 = vpop.f32.mrb[0].mxu0
    %v788 = vadd.f32 0.0, %v787
    %v789 = vpop.f32.mrb[0].mxu0
    %790 = vdwg.mxu0
    %v792 = vsel %vm55, %v271, 0
    %794 = vmatprep.subr.mxu0 0.0
    %795 = vmatpush1.xpose.msra.mxu0 %v792
    %796 = vmatprep.subr.mxu0 0.0
    %797 = vmatpush1.xpose.msra.mxu0 0.0
    %798 = vmatprep.subr.mxu0 0.0
    %799 = vmatpush1.xpose.msra.mxu0 0.0
    %800 = vmatprep.subr.mxu0 0.0
    %801 = vmatpush1.xpose.msra.mxu0 0.0
    %802 = vmatprep.subr.mxu0 0.0
    %803 = vmatpush1.xpose.msra.mxu0 0.0
    %804 = vmatprep.subr.mxu0 0.0
    %805 = vmatpush1.xpose.msra.mxu0 0.0
    %806 = vmatprep.subr.mxu0 0.0
    %807 = vmatpush1.xpose.msra.mxu0 0.0
    %808 = vmatprep.subr.mxu0 0.0
    %809 = vmatpush1.xpose.msra.mxu0 0.0
    %810 = vmatprep.subr.mxu0 0.0
    %811 = vmatpush1.xpose.msra.mxu0 0.0
    %812 = vmatprep.subr.mxu0 0.0
    %813 = vmatpush1.xpose.msra.mxu0 0.0
    %814 = vmatprep.subr.mxu0 0.0
    %815 = vmatpush1.xpose.msra.mxu0 0.0
    %816 = vmatprep.subr.mxu0 0.0
    %817 = vmatpush1.xpose.msra.mxu0 0.0
    %818 = vmatprep.subr.mxu0 0.0
    %819 = vmatpush1.xpose.msra.mxu0 0.0
    %820 = vmatprep.subr.mxu0 0.0
    %821 = vmatpush1.xpose.msra.mxu0 0.0
    %822 = vmatprep.subr.mxu0 0.0
    %823 = vmatpush1.xpose.msra.mxu0 0.0
    %824 = vmatprep.subr.mxu0 0.0
    %825 = vmatpush1.xpose.msra.mxu0 0.0
    %826 = vmatprep.subr.mxu0 0.0
    %827 = vmatpush1.xpose.msra.mxu0 0.0
    %828 = vmatprep.subr.mxu0 0.0
    %829 = vmatpush1.xpose.msra.mxu0 0.0
    %830 = vmatprep.subr.mxu0 0.0
    %831 = vmatpush1.xpose.msra.mxu0 0.0
    %832 = vmatprep.subr.mxu0 0.0
    %833 = vmatpush1.xpose.msra.mxu0 0.0
    %834 = vmatprep.subr.mxu0 0.0
    %835 = vmatpush1.xpose.msra.mxu0 0.0
    %836 = vmatprep.subr.mxu0 0.0
    %837 = vmatpush1.xpose.msra.mxu0 0.0
    %838 = vmatprep.subr.mxu0 0.0
    %839 = vmatpush1.xpose.msra.mxu0 0.0
    %840 = vmatprep.subr.mxu0 0.0
    %841 = vmatpush1.xpose.msra.mxu0 0.0
    %842 = vmatprep.subr.mxu0 0.0
    %843 = vmatpush1.xpose.msra.mxu0 0.0
    %844 = vmatprep.subr.mxu0 0.0
    %845 = vmatpush1.xpose.msra.mxu0 0.0
    %846 = vmatprep.subr.mxu0 0.0
    %847 = vmatpush1.xpose.msra.mxu0 0.0
    %848 = vmatprep.subr.mxu0 0.0
    %849 = vmatpush1.xpose.msra.mxu0 0.0
    %850 = vmatprep.subr.mxu0 0.0
    %851 = vmatpush1.xpose.msra.mxu0 0.0
    %852 = vmatprep.subr.mxu0 0.0
    %853 = vmatpush1.xpose.msra.mxu0 0.0
    %854 = vmatprep.subr.mxu0 0.0
    %855 = vmatpush1.xpose.msra.mxu0 0.0
    %856 = vmatprep.subr.mxu0 0.0
    %857 = vmatpush1.xpose.msra.mxu0 0.0
    %858 = vmatprep.mubr.f32.mxu0 0.0
    %859 = vmatmul.mubr.f32.gmra.mrb[0].mxu0 %v792
    %v860 = vpop.f32.mrb[0].mxu0
    %v861 = vadd.f32 0.0, %v860
    %v862 = vpop.f32.mrb[0].mxu0
    %863 = vdwg.mxu0
    %v865 = vsel %vm55, %v272, 0
    %867 = vmatprep.subr.mxu0 0.0
    %868 = vmatpush1.xpose.msra.mxu0 %v865
    %869 = vmatprep.subr.mxu0 0.0
    %870 = vmatpush1.xpose.msra.mxu0 0.0
    %871 = vmatprep.subr.mxu0 0.0
    %872 = vmatpush1.xpose.msra.mxu0 0.0
    %873 = vmatprep.subr.mxu0 0.0
    %874 = vmatpush1.xpose.msra.mxu0 0.0
    %875 = vmatprep.subr.mxu0 0.0
    %876 = vmatpush1.xpose.msra.mxu0 0.0
    %877 = vmatprep.subr.mxu0 0.0
    %878 = vmatpush1.xpose.msra.mxu0 0.0
    %879 = vmatprep.subr.mxu0 0.0
    %880 = vmatpush1.xpose.msra.mxu0 0.0
    %881 = vmatprep.subr.mxu0 0.0
    %882 = vmatpush1.xpose.msra.mxu0 0.0
    %883 = vmatprep.subr.mxu0 0.0
    %884 = vmatpush1.xpose.msra.mxu0 0.0
    %885 = vmatprep.subr.mxu0 0.0
    %886 = vmatpush1.xpose.msra.mxu0 0.0
    %887 = vmatprep.subr.mxu0 0.0
    %888 = vmatpush1.xpose.msra.mxu0 0.0
    %889 = vmatprep.subr.mxu0 0.0
    %890 = vmatpush1.xpose.msra.mxu0 0.0
    %891 = vmatprep.subr.mxu0 0.0
    %892 = vmatpush1.xpose.msra.mxu0 0.0
    %893 = vmatprep.subr.mxu0 0.0
    %894 = vmatpush1.xpose.msra.mxu0 0.0
    %895 = vmatprep.subr.mxu0 0.0
    %896 = vmatpush1.xpose.msra.mxu0 0.0
    %897 = vmatprep.subr.mxu0 0.0
    %898 = vmatpush1.xpose.msra.mxu0 0.0
    %899 = vmatprep.subr.mxu0 0.0
    %900 = vmatpush1.xpose.msra.mxu0 0.0
    %901 = vmatprep.subr.mxu0 0.0
    %902 = vmatpush1.xpose.msra.mxu0 0.0
    %903 = vmatprep.subr.mxu0 0.0
    %904 = vmatpush1.xpose.msra.mxu0 0.0
    %905 = vmatprep.subr.mxu0 0.0
    %906 = vmatpush1.xpose.msra.mxu0 0.0
    %907 = vmatprep.subr.mxu0 0.0
    %908 = vmatpush1.xpose.msra.mxu0 0.0
    %909 = vmatprep.subr.mxu0 0.0
    %910 = vmatpush1.xpose.msra.mxu0 0.0
    %911 = vmatprep.subr.mxu0 0.0
    %912 = vmatpush1.xpose.msra.mxu0 0.0
    %913 = vmatprep.subr.mxu0 0.0
    %914 = vmatpush1.xpose.msra.mxu0 0.0
    %915 = vmatprep.subr.mxu0 0.0
    %916 = vmatpush1.xpose.msra.mxu0 0.0
    %917 = vmatprep.subr.mxu0 0.0
    %918 = vmatpush1.xpose.msra.mxu0 0.0
    %919 = vmatprep.subr.mxu0 0.0
    %920 = vmatpush1.xpose.msra.mxu0 0.0
    %921 = vmatprep.subr.mxu0 0.0
    %922 = vmatpush1.xpose.msra.mxu0 0.0
    %923 = vmatprep.subr.mxu0 0.0
    %924 = vmatpush1.xpose.msra.mxu0 0.0
    %925 = vmatprep.subr.mxu0 0.0
    %926 = vmatpush1.xpose.msra.mxu0 0.0
    %927 = vmatprep.subr.mxu0 0.0
    %928 = vmatpush1.xpose.msra.mxu0 0.0
    %929 = vmatprep.subr.mxu0 0.0
    %930 = vmatpush1.xpose.msra.mxu0 0.0
    %931 = vmatprep.mubr.f32.mxu0 0.0
    %932 = vmatmul.mubr.f32.gmra.mrb[0].mxu0 %v865
    %v933 = vpop.f32.mrb[0].mxu0
    %v934 = vadd.f32 0.0, %v933
    %v935 = vpop.f32.mrb[0].mxu0
    %936 = vdwg.mxu0
    %v938 = vsel %vm55, %v273, 0
    %940 = vmatprep.subr.mxu0 0.0
    %941 = vmatpush1.xpose.msra.mxu0 %v938
    %942 = vmatprep.subr.mxu0 0.0
    %943 = vmatpush1.xpose.msra.mxu0 0.0
    %944 = vmatprep.subr.mxu0 0.0
    %945 = vmatpush1.xpose.msra.mxu0 0.0
    %946 = vmatprep.subr.mxu0 0.0
    %947 = vmatpush1.xpose.msra.mxu0 0.0
    %948 = vmatprep.subr.mxu0 0.0
    %949 = vmatpush1.xpose.msra.mxu0 0.0
    %950 = vmatprep.subr.mxu0 0.0
    %951 = vmatpush1.xpose.msra.mxu0 0.0
    %952 = vmatprep.subr.mxu0 0.0
    %953 = vmatpush1.xpose.msra.mxu0 0.0
    %954 = vmatprep.subr.mxu0 0.0
    %955 = vmatpush1.xpose.msra.mxu0 0.0
    %956 = vmatprep.subr.mxu0 0.0
    %957 = vmatpush1.xpose.msra.mxu0 0.0
    %958 = vmatprep.subr.mxu0 0.0
    %959 = vmatpush1.xpose.msra.mxu0 0.0
    %960 = vmatprep.subr.mxu0 0.0
    %961 = vmatpush1.xpose.msra.mxu0 0.0
    %962 = vmatprep.subr.mxu0 0.0
    %963 = vmatpush1.xpose.msra.mxu0 0.0
    %964 = vmatprep.subr.mxu0 0.0
    %965 = vmatpush1.xpose.msra.mxu0 0.0
    %966 = vmatprep.subr.mxu0 0.0
    %967 = vmatpush1.xpose.msra.mxu0 0.0
    %968 = vmatprep.subr.mxu0 0.0
    %969 = vmatpush1.xpose.msra.mxu0 0.0
    %970 = vmatprep.subr.mxu0 0.0
    %971 = vmatpush1.xpose.msra.mxu0 0.0
    %972 = vmatprep.subr.mxu0 0.0
    %973 = vmatpush1.xpose.msra.mxu0 0.0
    %974 = vmatprep.subr.mxu0 0.0
    %975 = vmatpush1.xpose.msra.mxu0 0.0
    %976 = vmatprep.subr.mxu0 0.0
    %977 = vmatpush1.xpose.msra.mxu0 0.0
    %978 = vmatprep.subr.mxu0 0.0
    %979 = vmatpush1.xpose.msra.mxu0 0.0
    %980 = vmatprep.subr.mxu0 0.0
    %981 = vmatpush1.xpose.msra.mxu0 0.0
    %982 = vmatprep.subr.mxu0 0.0
    %983 = vmatpush1.xpose.msra.mxu0 0.0
    %984 = vmatprep.subr.mxu0 0.0
    %985 = vmatpush1.xpose.msra.mxu0 0.0
    %986 = vmatprep.subr.mxu0 0.0
    %987 = vmatpush1.xpose.msra.mxu0 0.0
    %988 = vmatprep.subr.mxu0 0.0
    %989 = vmatpush1.xpose.msra.mxu0 0.0
    %990 = vmatprep.subr.mxu0 0.0
    %991 = vmatpush1.xpose.msra.mxu0 0.0
    %992 = vmatprep.subr.mxu0 0.0
    %993 = vmatpush1.xpose.msra.mxu0 0.0
    %994 = vmatprep.subr.mxu0 0.0
    %995 = vmatpush1.xpose.msra.mxu0 0.0
    %996 = vmatprep.subr.mxu0 0.0
    %997 = vmatpush1.xpose.msra.mxu0 0.0
    %998 = vmatprep.subr.mxu0 0.0
    %999 = vmatpush1.xpose.msra.mxu0 0.0
    %1000 = vmatprep.subr.mxu0 0.0
    %1001 = vmatpush1.xpose.msra.mxu0 0.0
    %1002 = vmatprep.subr.mxu0 0.0
    %1003 = vmatpush1.xpose.msra.mxu0 0.0
    %1004 = vmatprep.mubr.f32.mxu0 0.0
    %1005 = vmatmul.mubr.f32.gmra.mrb[0].mxu0 %v938
    %v1006 = vpop.f32.mrb[0].mxu0
    %v1007 = vadd.f32 0.0, %v1006
    %v1008 = vpop.f32.mrb[0].mxu0
    %1009 = vdwg.mxu0
    %v1011 = vsel %vm55, %v274, 0
    %1013 = vmatprep.subr.mxu0 0.0
    %1014 = vmatpush1.xpose.msra.mxu0 %v1011
    %1015 = vmatprep.subr.mxu0 0.0
    %1016 = vmatpush1.xpose.msra.mxu0 0.0
    %1017 = vmatprep.subr.mxu0 0.0
    %1018 = vmatpush1.xpose.msra.mxu0 0.0
    %1019 = vmatprep.subr.mxu0 0.0
    %1020 = vmatpush1.xpose.msra.mxu0 0.0
    %1021 = vmatprep.subr.mxu0 0.0
    %1022 = vmatpush1.xpose.msra.mxu0 0.0
    %1023 = vmatprep.subr.mxu0 0.0
    %1024 = vmatpush1.xpose.msra.mxu0 0.0
    %1025 = vmatprep.subr.mxu0 0.0
    %1026 = vmatpush1.xpose.msra.mxu0 0.0
    %1027 = vmatprep.subr.mxu0 0.0
    %1028 = vmatpush1.xpose.msra.mxu0 0.0
    %1029 = vmatprep.subr.mxu0 0.0
    %1030 = vmatpush1.xpose.msra.mxu0 0.0
    %1031 = vmatprep.subr.mxu0 0.0
    %1032 = vmatpush1.xpose.msra.mxu0 0.0
    %1033 = vmatprep.subr.mxu0 0.0
    %1034 = vmatpush1.xpose.msra.mxu0 0.0
    %1035 = vmatprep.subr.mxu0 0.0
    %1036 = vmatpush1.xpose.msra.mxu0 0.0
    %1037 = vmatprep.subr.mxu0 0.0
    %1038 = vmatpush1.xpose.msra.mxu0 0.0
    %1039 = vmatprep.subr.mxu0 0.0
    %1040 = vmatpush1.xpose.msra.mxu0 0.0
    %1041 = vmatprep.subr.mxu0 0.0
    %1042 = vmatpush1.xpose.msra.mxu0 0.0
    %1043 = vmatprep.subr.mxu0 0.0
    %1044 = vmatpush1.xpose.msra.mxu0 0.0
    %1045 = vmatprep.subr.mxu0 0.0
    %1046 = vmatpush1.xpose.msra.mxu0 0.0
    %1047 = vmatprep.subr.mxu0 0.0
    %1048 = vmatpush1.xpose.msra.mxu0 0.0
    %1049 = vmatprep.subr.mxu0 0.0
    %1050 = vmatpush1.xpose.msra.mxu0 0.0
    %1051 = vmatprep.subr.mxu0 0.0
    %1052 = vmatpush1.xpose.msra.mxu0 0.0
    %1053 = vmatprep.subr.mxu0 0.0
    %1054 = vmatpush1.xpose.msra.mxu0 0.0
    %1055 = vmatprep.subr.mxu0 0.0
    %1056 = vmatpush1.xpose.msra.mxu0 0.0
    %1057 = vmatprep.subr.mxu0 0.0
    %1058 = vmatpush1.xpose.msra.mxu0 0.0
    %1059 = vmatprep.subr.mxu0 0.0
    %1060 = vmatpush1.xpose.msra.mxu0 0.0
    %1061 = vmatprep.subr.mxu0 0.0
    %1062 = vmatpush1.xpose.msra.mxu0 0.0
    %1063 = vmatprep.subr.mxu0 0.0
    %1064 = vmatpush1.xpose.msra.mxu0 0.0
    %1065 = vmatprep.subr.mxu0 0.0
    %1066 = vmatpush1.xpose.msra.mxu0 0.0
    %1067 = vmatprep.subr.mxu0 0.0
    %1068 = vmatpush1.xpose.msra.mxu0 0.0
    %1069 = vmatprep.subr.mxu0 0.0
    %1070 = vmatpush1.xpose.msra.mxu0 0.0
    %1071 = vmatprep.subr.mxu0 0.0
    %1072 = vmatpush1.xpose.msra.mxu0 0.0
    %1073 = vmatprep.subr.mxu0 0.0
    %1074 = vmatpush1.xpose.msra.mxu0 0.0
    %1075 = vmatprep.subr.mxu0 0.0
    %1076 = vmatpush1.xpose.msra.mxu0 0.0
    %1077 = vmatprep.mubr.f32.mxu0 0.0
    %1078 = vmatmul.mubr.f32.gmra.mrb[0].mxu0 %v1011
    %v1079 = vpop.f32.mrb[0].mxu0
    %v1080 = vadd.f32 0.0, %v1079
    %v1081 = vpop.f32.mrb[0].mxu0
    %1082 = vdwg.mxu0
    %v1084 = vsel %vm55, %v275, 0
    %1086 = vmatprep.subr.mxu0 0.0
    %1087 = vmatpush1.xpose.msra.mxu0 %v1084
    %1088 = vmatprep.subr.mxu0 0.0
    %1089 = vmatpush1.xpose.msra.mxu0 0.0
    %1090 = vmatprep.subr.mxu0 0.0
    %1091 = vmatpush1.xpose.msra.mxu0 0.0
    %1092 = vmatprep.subr.mxu0 0.0
    %1093 = vmatpush1.xpose.msra.mxu0 0.0
    %1094 = vmatprep.subr.mxu0 0.0
    %1095 = vmatpush1.xpose.msra.mxu0 0.0
    %1096 = vmatprep.subr.mxu0 0.0
    %1097 = vmatpush1.xpose.msra.mxu0 0.0
    %1098 = vmatprep.subr.mxu0 0.0
    %1099 = vmatpush1.xpose.msra.mxu0 0.0
    %1100 = vmatprep.subr.mxu0 0.0
    %1101 = vmatpush1.xpose.msra.mxu0 0.0
    %1102 = vmatprep.subr.mxu0 0.0
    %1103 = vmatpush1.xpose.msra.mxu0 0.0
    %1104 = vmatprep.subr.mxu0 0.0
    %1105 = vmatpush1.xpose.msra.mxu0 0.0
    %1106 = vmatprep.subr.mxu0 0.0
    %1107 = vmatpush1.xpose.msra.mxu0 0.0
    %1108 = vmatprep.subr.mxu0 0.0
    %1109 = vmatpush1.xpose.msra.mxu0 0.0
    %1110 = vmatprep.subr.mxu0 0.0
    %1111 = vmatpush1.xpose.msra.mxu0 0.0
    %1112 = vmatprep.subr.mxu0 0.0
    %1113 = vmatpush1.xpose.msra.mxu0 0.0
    %1114 = vmatprep.subr.mxu0 0.0
    %1115 = vmatpush1.xpose.msra.mxu0 0.0
    %1116 = vmatprep.subr.mxu0 0.0
    %1117 = vmatpush1.xpose.msra.mxu0 0.0
    %1118 = vmatprep.subr.mxu0 0.0
    %1119 = vmatpush1.xpose.msra.mxu0 0.0
    %1120 = vmatprep.subr.mxu0 0.0
    %1121 = vmatpush1.xpose.msra.mxu0 0.0
    %1122 = vmatprep.subr.mxu0 0.0
    %1123 = vmatpush1.xpose.msra.mxu0 0.0
    %1124 = vmatprep.subr.mxu0 0.0
    %1125 = vmatpush1.xpose.msra.mxu0 0.0
    %1126 = vmatprep.subr.mxu0 0.0
    %1127 = vmatpush1.xpose.msra.mxu0 0.0
    %1128 = vmatprep.subr.mxu0 0.0
    %1129 = vmatpush1.xpose.msra.mxu0 0.0
    %1130 = vmatprep.subr.mxu0 0.0
    %1131 = vmatpush1.xpose.msra.mxu0 0.0
    %1132 = vmatprep.subr.mxu0 0.0
    %1133 = vmatpush1.xpose.msra.mxu0 0.0
    %1134 = vmatprep.subr.mxu0 0.0
    %1135 = vmatpush1.xpose.msra.mxu0 0.0
    %1136 = vmatprep.subr.mxu0 0.0
    %1137 = vmatpush1.xpose.msra.mxu0 0.0
    %1138 = vmatprep.subr.mxu0 0.0
    %1139 = vmatpush1.xpose.msra.mxu0 0.0
    %1140 = vmatprep.subr.mxu0 0.0
    %1141 = vmatpush1.xpose.msra.mxu0 0.0
    %1142 = vmatprep.subr.mxu0 0.0
    %1143 = vmatpush1.xpose.msra.mxu0 0.0
    %1144 = vmatprep.subr.mxu0 0.0
    %1145 = vmatpush1.xpose.msra.mxu0 0.0
    %1146 = vmatprep.subr.mxu0 0.0
    %1147 = vmatpush1.xpose.msra.mxu0 0.0
    %1148 = vmatprep.subr.mxu0 0.0
    %1149 = vmatpush1.xpose.msra.mxu0 0.0
    %1150 = vmatprep.mubr.f32.mxu0 0.0
    %1151 = vmatmul.mubr.f32.gmra.mrb[0].mxu0 %v1084
    %v1152 = vpop.f32.mrb[0].mxu0
    %v1153 = vadd.f32 0.0, %v1152
    %v1154 = vpop.f32.mrb[0].mxu0
    %1155 = vdwg.mxu0
    %v1157 = vsel %vm55, %v276, 0
    %1159 = vmatprep.subr.mxu0 0.0
    %1160 = vmatpush1.xpose.msra.mxu0 %v1157
    %1161 = vmatprep.subr.mxu0 0.0
    %1162 = vmatpush1.xpose.msra.mxu0 0.0
    %1163 = vmatprep.subr.mxu0 0.0
    %1164 = vmatpush1.xpose.msra.mxu0 0.0
    %1165 = vmatprep.subr.mxu0 0.0
    %1166 = vmatpush1.xpose.msra.mxu0 0.0
    %1167 = vmatprep.subr.mxu0 0.0
    %1168 = vmatpush1.xpose.msra.mxu0 0.0
    %1169 = vmatprep.subr.mxu0 0.0
    %1170 = vmatpush1.xpose.msra.mxu0 0.0
    %1171 = vmatprep.subr.mxu0 0.0
    %1172 = vmatpush1.xpose.msra.mxu0 0.0
    %1173 = vmatprep.subr.mxu0 0.0
    %1174 = vmatpush1.xpose.msra.mxu0 0.0
    %1175 = vmatprep.subr.mxu0 0.0
    %1176 = vmatpush1.xpose.msra.mxu0 0.0
    %1177 = vmatprep.subr.mxu0 0.0
    %1178 = vmatpush1.xpose.msra.mxu0 0.0
    %1179 = vmatprep.subr.mxu0 0.0
    %1180 = vmatpush1.xpose.msra.mxu0 0.0
    %1181 = vmatprep.subr.mxu0 0.0
    %1182 = vmatpush1.xpose.msra.mxu0 0.0
    %1183 = vmatprep.subr.mxu0 0.0
    %1184 = vmatpush1.xpose.msra.mxu0 0.0
    %1185 = vmatprep.subr.mxu0 0.0
    %1186 = vmatpush1.xpose.msra.mxu0 0.0
    %1187 = vmatprep.subr.mxu0 0.0
    %1188 = vmatpush1.xpose.msra.mxu0 0.0
    %1189 = vmatprep.subr.mxu0 0.0
    %1190 = vmatpush1.xpose.msra.mxu0 0.0
    %1191 = vmatprep.subr.mxu0 0.0
    %1192 = vmatpush1.xpose.msra.mxu0 0.0
    %1193 = vmatprep.subr.mxu0 0.0
    %1194 = vmatpush1.xpose.msra.mxu0 0.0
    %1195 = vmatprep.subr.mxu0 0.0
    %1196 = vmatpush1.xpose.msra.mxu0 0.0
    %1197 = vmatprep.subr.mxu0 0.0
    %1198 = vmatpush1.xpose.msra.mxu0 0.0
    %1199 = vmatprep.subr.mxu0 0.0
    %1200 = vmatpush1.xpose.msra.mxu0 0.0
    %1201 = vmatprep.subr.mxu0 0.0
    %1202 = vmatpush1.xpose.msra.mxu0 0.0
    %1203 = vmatprep.subr.mxu0 0.0
    %1204 = vmatpush1.xpose.msra.mxu0 0.0
    %1205 = vmatprep.subr.mxu0 0.0
    %1206 = vmatpush1.xpose.msra.mxu0 0.0
    %1207 = vmatprep.subr.mxu0 0.0
    %1208 = vmatpush1.xpose.msra.mxu0 0.0
    %1209 = vmatprep.subr.mxu0 0.0
    %1210 = vmatpush1.xpose.msra.mxu0 0.0
    %1211 = vmatprep.subr.mxu0 0.0
    %1212 = vmatpush1.xpose.msra.mxu0 0.0
    %1213 = vmatprep.subr.mxu0 0.0
    %1214 = vmatpush1.xpose.msra.mxu0 0.0
    %1215 = vmatprep.subr.mxu0 0.0
    %1216 = vmatpush1.xpose.msra.mxu0 0.0
    %1217 = vmatprep.subr.mxu0 0.0
    %1218 = vmatpush1.xpose.msra.mxu0 0.0
    %1219 = vmatprep.subr.mxu0 0.0
    %1220 = vmatpush1.xpose.msra.mxu0 0.0
    %1221 = vmatprep.subr.mxu0 0.0
    %1222 = vmatpush1.xpose.msra.mxu0 0.0
    %1223 = vmatprep.mubr.f32.mxu0 0.0
    %1224 = vmatmul.mubr.f32.gmra.mrb[0].mxu0 %v1157
    %v1225 = vpop.f32.mrb[0].mxu0
    %v1226 = vadd.f32 0.0, %v1225
    %v1227 = vpop.f32.mrb[0].mxu0
    %1228 = vdwg.mxu0
    %v1230 = vsel %vm55, %v277, 0
    %1232 = vmatprep.subr.mxu0 0.0
    %1233 = vmatpush1.xpose.msra.mxu0 %v1230
    %1234 = vmatprep.subr.mxu0 0.0
    %1235 = vmatpush1.xpose.msra.mxu0 0.0
    %1236 = vmatprep.subr.mxu0 0.0
    %1237 = vmatpush1.xpose.msra.mxu0 0.0
    %1238 = vmatprep.subr.mxu0 0.0
    %1239 = vmatpush1.xpose.msra.mxu0 0.0
    %1240 = vmatprep.subr.mxu0 0.0
    %1241 = vmatpush1.xpose.msra.mxu0 0.0
    %1242 = vmatprep.subr.mxu0 0.0
    %1243 = vmatpush1.xpose.msra.mxu0 0.0
    %1244 = vmatprep.subr.mxu0 0.0
    %1245 = vmatpush1.xpose.msra.mxu0 0.0
    %1246 = vmatprep.subr.mxu0 0.0
    %1247 = vmatpush1.xpose.msra.mxu0 0.0
    %1248 = vmatprep.subr.mxu0 0.0
    %1249 = vmatpush1.xpose.msra.mxu0 0.0
    %1250 = vmatprep.subr.mxu0 0.0
    %1251 = vmatpush1.xpose.msra.mxu0 0.0
    %1252 = vmatprep.subr.mxu0 0.0
    %1253 = vmatpush1.xpose.msra.mxu0 0.0
    %1254 = vmatprep.subr.mxu0 0.0
    %1255 = vmatpush1.xpose.msra.mxu0 0.0
    %1256 = vmatprep.subr.mxu0 0.0
    %1257 = vmatpush1.xpose.msra.mxu0 0.0
    %1258 = vmatprep.subr.mxu0 0.0
    %1259 = vmatpush1.xpose.msra.mxu0 0.0
    %1260 = vmatprep.subr.mxu0 0.0
    %1261 = vmatpush1.xpose.msra.mxu0 0.0
    %1262 = vmatprep.subr.mxu0 0.0
    %1263 = vmatpush1.xpose.msra.mxu0 0.0
    %1264 = vmatprep.subr.mxu0 0.0
    %1265 = vmatpush1.xpose.msra.mxu0 0.0
    %1266 = vmatprep.subr.mxu0 0.0
    %1267 = vmatpush1.xpose.msra.mxu0 0.0
    %1268 = vmatprep.subr.mxu0 0.0
    %1269 = vmatpush1.xpose.msra.mxu0 0.0
    %1270 = vmatprep.subr.mxu0 0.0
    %1271 = vmatpush1.xpose.msra.mxu0 0.0
    %1272 = vmatprep.subr.mxu0 0.0
    %1273 = vmatpush1.xpose.msra.mxu0 0.0
    %1274 = vmatprep.subr.mxu0 0.0
    %1275 = vmatpush1.xpose.msra.mxu0 0.0
    %1276 = vmatprep.subr.mxu0 0.0
    %1277 = vmatpush1.xpose.msra.mxu0 0.0
    %1278 = vmatprep.subr.mxu0 0.0
    %1279 = vmatpush1.xpose.msra.mxu0 0.0
    %1280 = vmatprep.subr.mxu0 0.0
    %1281 = vmatpush1.xpose.msra.mxu0 0.0
    %1282 = vmatprep.subr.mxu0 0.0
    %1283 = vmatpush1.xpose.msra.mxu0 0.0
    %1284 = vmatprep.subr.mxu0 0.0
    %1285 = vmatpush1.xpose.msra.mxu0 0.0
    %1286 = vmatprep.subr.mxu0 0.0
    %1287 = vmatpush1.xpose.msra.mxu0 0.0
    %1288 = vmatprep.subr.mxu0 0.0
    %1289 = vmatpush1.xpose.msra.mxu0 0.0
    %1290 = vmatprep.subr.mxu0 0.0
    %1291 = vmatpush1.xpose.msra.mxu0 0.0
    %1292 = vmatprep.subr.mxu0 0.0
    %1293 = vmatpush1.xpose.msra.mxu0 0.0
    %1294 = vmatprep.subr.mxu0 0.0
    %1295 = vmatpush1.xpose.msra.mxu0 0.0
    %1296 = vmatprep.mubr.f32.mxu0 0.0
    %1297 = vmatmul.mubr.f32.gmra.mrb[0].mxu0 %v1230
    %v1298 = vpop.f32.mrb[0].mxu0
    %v1299 = vadd.f32 0.0, %v1298
    %v1300 = vpop.f32.mrb[0].mxu0
    %1301 = vdwg.mxu0
    %v1303 = vsel %vm55, %v278, 0
    %1305 = vmatprep.subr.mxu0 0.0
    %1306 = vmatpush1.xpose.msra.mxu0 %v1303
    %1307 = vmatprep.subr.mxu0 0.0
    %1308 = vmatpush1.xpose.msra.mxu0 0.0
    %1309 = vmatprep.subr.mxu0 0.0
    %1310 = vmatpush1.xpose.msra.mxu0 0.0
    %1311 = vmatprep.subr.mxu0 0.0
    %1312 = vmatpush1.xpose.msra.mxu0 0.0
    %1313 = vmatprep.subr.mxu0 0.0
    %1314 = vmatpush1.xpose.msra.mxu0 0.0
    %1315 = vmatprep.subr.mxu0 0.0
    %1316 = vmatpush1.xpose.msra.mxu0 0.0
    %1317 = vmatprep.subr.mxu0 0.0
    %1318 = vmatpush1.xpose.msra.mxu0 0.0
    %1319 = vmatprep.subr.mxu0 0.0
    %1320 = vmatpush1.xpose.msra.mxu0 0.0
    %1321 = vmatprep.subr.mxu0 0.0
    %1322 = vmatpush1.xpose.msra.mxu0 0.0
    %1323 = vmatprep.subr.mxu0 0.0
    %1324 = vmatpush1.xpose.msra.mxu0 0.0
    %1325 = vmatprep.subr.mxu0 0.0
    %1326 = vmatpush1.xpose.msra.mxu0 0.0
    %1327 = vmatprep.subr.mxu0 0.0
    %1328 = vmatpush1.xpose.msra.mxu0 0.0
    %1329 = vmatprep.subr.mxu0 0.0
    %1330 = vmatpush1.xpose.msra.mxu0 0.0
    %1331 = vmatprep.subr.mxu0 0.0
    %1332 = vmatpush1.xpose.msra.mxu0 0.0
    %1333 = vmatprep.subr.mxu0 0.0
    %1334 = vmatpush1.xpose.msra.mxu0 0.0
    %1335 = vmatprep.subr.mxu0 0.0
    %1336 = vmatpush1.xpose.msra.mxu0 0.0
    %1337 = vmatprep.subr.mxu0 0.0
    %1338 = vmatpush1.xpose.msra.mxu0 0.0
    %1339 = vmatprep.subr.mxu0 0.0
    %1340 = vmatpush1.xpose.msra.mxu0 0.0
    %1341 = vmatprep.subr.mxu0 0.0
    %1342 = vmatpush1.xpose.msra.mxu0 0.0
    %1343 = vmatprep.subr.mxu0 0.0
    %1344 = vmatpush1.xpose.msra.mxu0 0.0
    %1345 = vmatprep.subr.mxu0 0.0
    %1346 = vmatpush1.xpose.msra.mxu0 0.0
    %1347 = vmatprep.subr.mxu0 0.0
    %1348 = vmatpush1.xpose.msra.mxu0 0.0
    %1349 = vmatprep.subr.mxu0 0.0
    %1350 = vmatpush1.xpose.msra.mxu0 0.0
    %1351 = vmatprep.subr.mxu0 0.0
    %1352 = vmatpush1.xpose.msra.mxu0 0.0
    %1353 = vmatprep.subr.mxu0 0.0
    %1354 = vmatpush1.xpose.msra.mxu0 0.0
    %1355 = vmatprep.subr.mxu0 0.0
    %1356 = vmatpush1.xpose.msra.mxu0 0.0
    %1357 = vmatprep.subr.mxu0 0.0
    %1358 = vmatpush1.xpose.msra.mxu0 0.0
    %1359 = vmatprep.subr.mxu0 0.0
    %1360 = vmatpush1.xpose.msra.mxu0 0.0
    %1361 = vmatprep.subr.mxu0 0.0
    %1362 = vmatpush1.xpose.msra.mxu0 0.0
    %1363 = vmatprep.subr.mxu0 0.0
    %1364 = vmatpush1.xpose.msra.mxu0 0.0
    %1365 = vmatprep.subr.mxu0 0.0
    %1366 = vmatpush1.xpose.msra.mxu0 0.0
    %1367 = vmatprep.subr.mxu0 0.0
    %1368 = vmatpush1.xpose.msra.mxu0 0.0
    %1369 = vmatprep.mubr.f32.mxu0 0.0
    %1370 = vmatmul.mubr.f32.gmra.mrb[0].mxu0 %v1303
    %v1371 = vpop.f32.mrb[0].mxu0
    %v1372 = vadd.f32 0.0, %v1371
    %v1373 = vpop.f32.mrb[0].mxu0
    %1374 = vdwg.mxu0
    %v1376 = vsel %vm55, %v279, 0
    %1378 = vmatprep.subr.mxu0 0.0
    %1379 = vmatpush1.xpose.msra.mxu0 %v1376
    %1380 = vmatprep.subr.mxu0 0.0
    %1381 = vmatpush1.xpose.msra.mxu0 0.0
    %1382 = vmatprep.subr.mxu0 0.0
    %1383 = vmatpush1.xpose.msra.mxu0 0.0
    %1384 = vmatprep.subr.mxu0 0.0
    %1385 = vmatpush1.xpose.msra.mxu0 0.0
    %1386 = vmatprep.subr.mxu0 0.0
    %1387 = vmatpush1.xpose.msra.mxu0 0.0
    %1388 = vmatprep.subr.mxu0 0.0
    %1389 = vmatpush1.xpose.msra.mxu0 0.0
    %1390 = vmatprep.subr.mxu0 0.0
    %1391 = vmatpush1.xpose.msra.mxu0 0.0
    %1392 = vmatprep.subr.mxu0 0.0
    %1393 = vmatpush1.xpose.msra.mxu0 0.0
    %1394 = vmatprep.subr.mxu0 0.0
    %1395 = vmatpush1.xpose.msra.mxu0 0.0
    %1396 = vmatprep.subr.mxu0 0.0
    %1397 = vmatpush1.xpose.msra.mxu0 0.0
    %1398 = vmatprep.subr.mxu0 0.0
    %1399 = vmatpush1.xpose.msra.mxu0 0.0
    %1400 = vmatprep.subr.mxu0 0.0
    %1401 = vmatpush1.xpose.msra.mxu0 0.0
    %1402 = vmatprep.subr.mxu0 0.0
    %1403 = vmatpush1.xpose.msra.mxu0 0.0
    %1404 = vmatprep.subr.mxu0 0.0
    %1405 = vmatpush1.xpose.msra.mxu0 0.0
    %1406 = vmatprep.subr.mxu0 0.0
    %1407 = vmatpush1.xpose.msra.mxu0 0.0
    %1408 = vmatprep.subr.mxu0 0.0
    %1409 = vmatpush1.xpose.msra.mxu0 0.0
    %1410 = vmatprep.subr.mxu0 0.0
    %1411 = vmatpush1.xpose.msra.mxu0 0.0
    %1412 = vmatprep.subr.mxu0 0.0
    %1413 = vmatpush1.xpose.msra.mxu0 0.0
    %1414 = vmatprep.subr.mxu0 0.0
    %1415 = vmatpush1.xpose.msra.mxu0 0.0
    %1416 = vmatprep.subr.mxu0 0.0
    %1417 = vmatpush1.xpose.msra.mxu0 0.0
    %1418 = vmatprep.subr.mxu0 0.0
    %1419 = vmatpush1.xpose.msra.mxu0 0.0
    %1420 = vmatprep.subr.mxu0 0.0
    %1421 = vmatpush1.xpose.msra.mxu0 0.0
    %1422 = vmatprep.subr.mxu0 0.0
    %1423 = vmatpush1.xpose.msra.mxu0 0.0
    %1424 = vmatprep.subr.mxu0 0.0
    %1425 = vmatpush1.xpose.msra.mxu0 0.0
    %1426 = vmatprep.subr.mxu0 0.0
    %1427 = vmatpush1.xpose.msra.mxu0 0.0
    %1428 = vmatprep.subr.mxu0 0.0
    %1429 = vmatpush1.xpose.msra.mxu0 0.0
    %1430 = vmatprep.subr.mxu0 0.0
    %1431 = vmatpush1.xpose.msra.mxu0 0.0
    %1432 = vmatprep.subr.mxu0 0.0
    %1433 = vmatpush1.xpose.msra.mxu0 0.0
    %1434 = vmatprep.subr.mxu0 0.0
    %1435 = vmatpush1.xpose.msra.mxu0 0.0
    %1436 = vmatprep.subr.mxu0 0.0
    %1437 = vmatpush1.xpose.msra.mxu0 0.0
    %1438 = vmatprep.subr.mxu0 0.0
    %1439 = vmatpush1.xpose.msra.mxu0 0.0
    %1440 = vmatprep.subr.mxu0 0.0
    %1441 = vmatpush1.xpose.msra.mxu0 0.0
    %1442 = vmatprep.mubr.f32.mxu0 0.0
    %1443 = vmatmul.mubr.f32.gmra.mrb[0].mxu0 %v1376
    %v1444 = vpop.f32.mrb[0].mxu0
    %v1445 = vadd.f32 0.0, %v1444
    %v1446 = vpop.f32.mrb[0].mxu0
    %1447 = vdwg.mxu0
    %v1448 = vcombine.low %v350, %v496
    %v1449 = vcombine.high %v350, %v496
    %v1451 = vunpack.c.l.s4 1983009808
    %v1452 = vunpack.c.0.s8 %v1451
    %v1453 = vlaneseq
    %v1454 = vshrl.u32 %v1453, 7
    %v1455 = vsub.s32 %v1452, %v1454
    %v1456 = vrot.slane %v1448, %v1455
    %v1458 = vunpack.c.l.s4 1983009808
    %v1459 = vunpack.c.0.s8 %v1458
    %v1460 = vlaneseq
    %v1461 = vshrl.u32 %v1460, 7
    %v1462 = vsub.s32 %v1459, %v1461
    %v1463 = vrot.slane %v1449, %v1462
    %v1464 = vcombine.low %v423, %v569
    %v1465 = vcombine.high %v423, %v569
    %v1467 = vunpack.c.l.s4 1983009808
    %v1468 = vunpack.c.0.s8 %v1467
    %v1469 = vlaneseq
    %v1470 = vshrl.u32 %v1469, 7
    %v1471 = vsub.s32 %v1468, %v1470
    %v1472 = vrot.slane %v1464, %v1471
    %v1474 = vunpack.c.l.s4 1983009808
    %v1475 = vunpack.c.0.s8 %v1474
    %v1476 = vlaneseq
    %v1477 = vshrl.u32 %v1476, 7
    %v1478 = vsub.s32 %v1475, %v1477
    %v1479 = vrot.slane %v1465, %v1478
    %v1480 = vcombine.low %v642, %v788
    %v1481 = vcombine.high %v642, %v788
    %v1483 = vunpack.c.l.s4 1983009808
    %v1484 = vunpack.c.0.s8 %v1483
    %v1485 = vlaneseq
    %v1486 = vshrl.u32 %v1485, 7
    %v1487 = vsub.s32 %v1484, %v1486
    %v1488 = vrot.slane %v1480, %v1487
    %v1490 = vunpack.c.l.s4 1983009808
    %v1491 = vunpack.c.0.s8 %v1490
    %v1492 = vlaneseq
    %v1493 = vshrl.u32 %v1492, 7
    %v1494 = vsub.s32 %v1491, %v1493
    %v1495 = vrot.slane %v1481, %v1494
    %v1496 = vcombine.low %v715, %v861
    %v1497 = vcombine.high %v715, %v861
    %v1499 = vunpack.c.l.s4 1983009808
    %v1500 = vunpack.c.0.s8 %v1499
    %v1501 = vlaneseq
    %v1502 = vshrl.u32 %v1501, 7
    %v1503 = vsub.s32 %v1500, %v1502
    %v1504 = vrot.slane %v1496, %v1503
    %v1506 = vunpack.c.l.s4 1983009808
    %v1507 = vunpack.c.0.s8 %v1506
    %v1508 = vlaneseq
    %v1509 = vshrl.u32 %v1508, 7
    %v1510 = vsub.s32 %v1507, %v1509
    %v1511 = vrot.slane %v1497, %v1510
    %v1512 = vcombine.low %v1456, %v1472
    %v1513 = vcombine.high %v1456, %v1472
    %v1515 = vunpack.c.l.s4 1934713408
    %v1516 = vunpack.c.0.s8 %v1515
    %v1517 = vlaneseq
    %v1518 = vshrl.u32 %v1517, 7
    %v1519 = vsub.s32 %v1516, %v1518
    %v1520 = vrot.slane %v1512, %v1519
    %v1522 = vunpack.c.l.s4 1934713408
    %v1523 = vunpack.c.0.s8 %v1522
    %v1524 = vlaneseq
    %v1525 = vshrl.u32 %v1524, 7
    %v1526 = vsub.s32 %v1523, %v1525
    %v1527 = vrot.slane %v1513, %v1526
    %v1528 = vcombine.low %v1463, %v1479
    %v1529 = vcombine.high %v1463, %v1479
    %v1531 = vunpack.c.l.s4 1934713408
    %v1532 = vunpack.c.0.s8 %v1531
    %v1533 = vlaneseq
    %v1534 = vshrl.u32 %v1533, 7
    %v1535 = vsub.s32 %v1532, %v1534
    %v1536 = vrot.slane %v1528, %v1535
    %v1538 = vunpack.c.l.s4 1934713408
    %v1539 = vunpack.c.0.s8 %v1538
    %v1540 = vlaneseq
    %v1541 = vshrl.u32 %v1540, 7
    %v1542 = vsub.s32 %v1539, %v1541
    %v1543 = vrot.slane %v1529, %v1542
    %v1544 = vcombine.low %v1488, %v1504
    %v1545 = vcombine.high %v1488, %v1504
    %v1547 = vunpack.c.l.s4 1934713408
    %v1548 = vunpack.c.0.s8 %v1547
    %v1549 = vlaneseq
    %v1550 = vshrl.u32 %v1549, 7
    %v1551 = vsub.s32 %v1548, %v1550
    %v1552 = vrot.slane %v1544, %v1551
    %v1554 = vunpack.c.l.s4 1934713408
    %v1555 = vunpack.c.0.s8 %v1554
    %v1556 = vlaneseq
    %v1557 = vshrl.u32 %v1556, 7
    %v1558 = vsub.s32 %v1555, %v1557
    %v1559 = vrot.slane %v1545, %v1558
    %v1560 = vcombine.low %v1495, %v1511
    %v1561 = vcombine.high %v1495, %v1511
    %v1563 = vunpack.c.l.s4 1934713408
    %v1564 = vunpack.c.0.s8 %v1563
    %v1565 = vlaneseq
    %v1566 = vshrl.u32 %v1565, 7
    %v1567 = vsub.s32 %v1564, %v1566
    %v1568 = vrot.slane %v1560, %v1567
    %v1570 = vunpack.c.l.s4 1934713408
    %v1571 = vunpack.c.0.s8 %v1570
    %v1572 = vlaneseq
    %v1573 = vshrl.u32 %v1572, 7
    %v1574 = vsub.s32 %v1571, %v1573
    %v1575 = vrot.slane %v1561, %v1574
    %v1576 = vcombine.low %v1520, %v1552
    %v1577 = vcombine.high %v1520, %v1552
    %v1578 = vcombine.low %v1527, %v1559
    %v1579 = vcombine.high %v1527, %v1559
    %v1580 = vcombine.low %v1536, %v1568
    %v1581 = vcombine.high %v1536, %v1568
    %v1582 = vcombine.low %v1543, %v1575
    %v1583 = vcombine.high %v1543, %v1575
    %v1584 = vcombine.low %v934, %v1080
    %v1585 = vcombine.high %v934, %v1080
    %v1587 = vunpack.c.l.s4 1983009808
    %v1588 = vunpack.c.0.s8 %v1587
    %v1589 = vlaneseq
    %v1590 = vshrl.u32 %v1589, 7
    %v1591 = vsub.s32 %v1588, %v1590
    %v1592 = vrot.slane %v1584, %v1591
    %v1594 = vunpack.c.l.s4 1983009808
    %v1595 = vunpack.c.0.s8 %v1594
    %v1596 = vlaneseq
    %v1597 = vshrl.u32 %v1596, 7
    %v1598 = vsub.s32 %v1595, %v1597
    %v1599 = vrot.slane %v1585, %v1598
    %v1600 = vcombine.low %v1007, %v1153
    %v1601 = vcombine.high %v1007, %v1153
    %v1603 = vunpack.c.l.s4 1983009808
    %v1604 = vunpack.c.0.s8 %v1603
    %v1605 = vlaneseq
    %v1606 = vshrl.u32 %v1605, 7
    %v1607 = vsub.s32 %v1604, %v1606
    %v1608 = vrot.slane %v1600, %v1607
    %v1610 = vunpack.c.l.s4 1983009808
    %v1611 = vunpack.c.0.s8 %v1610
    %v1612 = vlaneseq
    %v1613 = vshrl.u32 %v1612, 7
    %v1614 = vsub.s32 %v1611, %v1613
    %v1615 = vrot.slane %v1601, %v1614
    %v1616 = vcombine.low %v1226, %v1372
    %v1617 = vcombine.high %v1226, %v1372
    %v1619 = vunpack.c.l.s4 1983009808
    %v1620 = vunpack.c.0.s8 %v1619
    %v1621 = vlaneseq
    %v1622 = vshrl.u32 %v1621, 7
    %v1623 = vsub.s32 %v1620, %v1622
    %v1624 = vrot.slane %v1616, %v1623
    %v1626 = vunpack.c.l.s4 1983009808
    %v1627 = vunpack.c.0.s8 %v1626
    %v1628 = vlaneseq
    %v1629 = vshrl.u32 %v1628, 7
    %v1630 = vsub.s32 %v1627, %v1629
    %v1631 = vrot.slane %v1617, %v1630
    %v1632 = vcombine.low %v1299, %v1445
    %v1633 = vcombine.high %v1299, %v1445
    %v1635 = vunpack.c.l.s4 1983009808
    %v1636 = vunpack.c.0.s8 %v1635
    %v1637 = vlaneseq
    %v1638 = vshrl.u32 %v1637, 7
    %v1639 = vsub.s32 %v1636, %v1638
    %v1640 = vrot.slane %v1632, %v1639
    %v1642 = vunpack.c.l.s4 1983009808
    %v1643 = vunpack.c.0.s8 %v1642
    %v1644 = vlaneseq
    %v1645 = vshrl.u32 %v1644, 7
    %v1646 = vsub.s32 %v1643, %v1645
    %v1647 = vrot.slane %v1633, %v1646
    %v1648 = vcombine.low %v1592, %v1608
    %v1649 = vcombine.high %v1592, %v1608
    %v1651 = vunpack.c.l.s4 1934713408
    %v1652 = vunpack.c.0.s8 %v1651
    %v1653 = vlaneseq
    %v1654 = vshrl.u32 %v1653, 7
    %v1655 = vsub.s32 %v1652, %v1654
    %v1656 = vrot.slane %v1648, %v1655
    %v1658 = vunpack.c.l.s4 1934713408
    %v1659 = vunpack.c.0.s8 %v1658
    %v1660 = vlaneseq
    %v1661 = vshrl.u32 %v1660, 7
    %v1662 = vsub.s32 %v1659, %v1661
    %v1663 = vrot.slane %v1649, %v1662
    %v1664 = vcombine.low %v1599, %v1615
    %v1665 = vcombine.high %v1599, %v1615
    %v1667 = vunpack.c.l.s4 1934713408
    %v1668 = vunpack.c.0.s8 %v1667
    %v1669 = vlaneseq
    %v1670 = vshrl.u32 %v1669, 7
    %v1671 = vsub.s32 %v1668, %v1670
    %v1672 = vrot.slane %v1664, %v1671
    %v1674 = vunpack.c.l.s4 1934713408
    %v1675 = vunpack.c.0.s8 %v1674
    %v1676 = vlaneseq
    %v1677 = vshrl.u32 %v1676, 7
    %v1678 = vsub.s32 %v1675, %v1677
    %v1679 = vrot.slane %v1665, %v1678
    %v1680 = vcombine.low %v1624, %v1640
    %v1681 = vcombine.high %v1624, %v1640
    %v1683 = vunpack.c.l.s4 1934713408
    %v1684 = vunpack.c.0.s8 %v1683
    %v1685 = vlaneseq
    %v1686 = vshrl.u32 %v1685, 7
    %v1687 = vsub.s32 %v1684, %v1686
    %v1688 = vrot.slane %v1680, %v1687
    %v1690 = vunpack.c.l.s4 1934713408
    %v1691 = vunpack.c.0.s8 %v1690
    %v1692 = vlaneseq
    %v1693 = vshrl.u32 %v1692, 7
    %v1694 = vsub.s32 %v1691, %v1693
    %v1695 = vrot.slane %v1681, %v1694
    %v1696 = vcombine.low %v1631, %v1647
    %v1697 = vcombine.high %v1631, %v1647
    %v1699 = vunpack.c.l.s4 1934713408
    %v1700 = vunpack.c.0.s8 %v1699
    %v1701 = vlaneseq
    %v1702 = vshrl.u32 %v1701, 7
    %v1703 = vsub.s32 %v1700, %v1702
    %v1704 = vrot.slane %v1696, %v1703
    %v1706 = vunpack.c.l.s4 1934713408
    %v1707 = vunpack.c.0.s8 %v1706
    %v1708 = vlaneseq
    %v1709 = vshrl.u32 %v1708, 7
    %v1710 = vsub.s32 %v1707, %v1709
    %v1711 = vrot.slane %v1697, %v1710
    %v1712 = vcombine.low %v1656, %v1688
    %v1713 = vcombine.high %v1656, %v1688
    %v1714 = vcombine.low %v1663, %v1695
    %v1715 = vcombine.high %v1663, %v1695
    %v1716 = vcombine.low %v1672, %v1704
    %v1717 = vcombine.high %v1672, %v1704
    %v1718 = vcombine.low %v1679, %v1711
    %v1719 = vcombine.high %v1679, %v1711
    %v1720 = vcombine.low %v1576, %v1578
    %v1721 = vcombine.high %v1576, %v1578
    %v1723 = vunpack.c.l.s4 1983009808
    %v1724 = vunpack.c.0.s8 %v1723
    %v1725 = vlaneseq
    %v1726 = vshrl.u32 %v1725, 7
    %v1727 = vsub.s32 %v1724, %v1726
    %v1728 = vrot.slane %v1720, %v1727
    %v1730 = vunpack.c.l.s4 1983009808
    %v1731 = vunpack.c.0.s8 %v1730
    %v1732 = vlaneseq
    %v1733 = vshrl.u32 %v1732, 7
    %v1734 = vsub.s32 %v1731, %v1733
    %v1735 = vrot.slane %v1721, %v1734
    %v1736 = vcombine.low %v1577, %v1579
    %v1737 = vcombine.high %v1577, %v1579
    %v1739 = vunpack.c.l.s4 1983009808
    %v1740 = vunpack.c.0.s8 %v1739
    %v1741 = vlaneseq
    %v1742 = vshrl.u32 %v1741, 7
    %v1743 = vsub.s32 %v1740, %v1742
    %v1744 = vrot.slane %v1736, %v1743
    %v1746 = vunpack.c.l.s4 1983009808
    %v1747 = vunpack.c.0.s8 %v1746
    %v1748 = vlaneseq
    %v1749 = vshrl.u32 %v1748, 7
    %v1750 = vsub.s32 %v1747, %v1749
    %v1751 = vrot.slane %v1737, %v1750
    %v1752 = vcombine.low %v1580, %v1582
    %v1753 = vcombine.high %v1580, %v1582
    %v1755 = vunpack.c.l.s4 1983009808
    %v1756 = vunpack.c.0.s8 %v1755
    %v1757 = vlaneseq
    %v1758 = vshrl.u32 %v1757, 7
    %v1759 = vsub.s32 %v1756, %v1758
    %v1760 = vrot.slane %v1752, %v1759
    %v1762 = vunpack.c.l.s4 1983009808
    %v1763 = vunpack.c.0.s8 %v1762
    %v1764 = vlaneseq
    %v1765 = vshrl.u32 %v1764, 7
    %v1766 = vsub.s32 %v1763, %v1765
    %v1767 = vrot.slane %v1753, %v1766
    %v1768 = vcombine.low %v1581, %v1583
    %v1769 = vcombine.high %v1581, %v1583
    %v1771 = vunpack.c.l.s4 1983009808
    %v1772 = vunpack.c.0.s8 %v1771
    %v1773 = vlaneseq
    %v1774 = vshrl.u32 %v1773, 7
    %v1775 = vsub.s32 %v1772, %v1774
    %v1776 = vrot.slane %v1768, %v1775
    %v1778 = vunpack.c.l.s4 1983009808
    %v1779 = vunpack.c.0.s8 %v1778
    %v1780 = vlaneseq
    %v1781 = vshrl.u32 %v1780, 7
    %v1782 = vsub.s32 %v1779, %v1781
    %v1783 = vrot.slane %v1769, %v1782
    %v1784 = vcombine.low %v1728, %v1744
    %v1785 = vcombine.high %v1728, %v1744
    %v1787 = vunpack.c.l.s4 1934713408
    %v1788 = vunpack.c.0.s8 %v1787
    %v1789 = vlaneseq
    %v1790 = vshrl.u32 %v1789, 7
    %v1791 = vsub.s32 %v1788, %v1790
    %v1792 = vrot.slane %v1784, %v1791
    %v1794 = vunpack.c.l.s4 1934713408
    %v1795 = vunpack.c.0.s8 %v1794
    %v1796 = vlaneseq
    %v1797 = vshrl.u32 %v1796, 7
    %v1798 = vsub.s32 %v1795, %v1797
    %v1799 = vrot.slane %v1785, %v1798
    %v1800 = vcombine.low %v1735, %v1751
    %v1801 = vcombine.high %v1735, %v1751
    %v1803 = vunpack.c.l.s4 1934713408
    %v1804 = vunpack.c.0.s8 %v1803
    %v1805 = vlaneseq
    %v1806 = vshrl.u32 %v1805, 7
    %v1807 = vsub.s32 %v1804, %v1806
    %v1808 = vrot.slane %v1800, %v1807
    %v1810 = vunpack.c.l.s4 1934713408
    %v1811 = vunpack.c.0.s8 %v1810
    %v1812 = vlaneseq
    %v1813 = vshrl.u32 %v1812, 7
    %v1814 = vsub.s32 %v1811, %v1813
    %v1815 = vrot.slane %v1801, %v1814
    %v1816 = vcombine.low %v1760, %v1776
    %v1817 = vcombine.high %v1760, %v1776
    %v1819 = vunpack.c.l.s4 1934713408
    %v1820 = vunpack.c.0.s8 %v1819
    %v1821 = vlaneseq
    %v1822 = vshrl.u32 %v1821, 7
    %v1823 = vsub.s32 %v1820, %v1822
    %v1824 = vrot.slane %v1816, %v1823
    %v1826 = vunpack.c.l.s4 1934713408
    %v1827 = vunpack.c.0.s8 %v1826
    %v1828 = vlaneseq
    %v1829 = vshrl.u32 %v1828, 7
    %v1830 = vsub.s32 %v1827, %v1829
    %v1831 = vrot.slane %v1817, %v1830
    %v1832 = vcombine.low %v1767, %v1783
    %v1833 = vcombine.high %v1767, %v1783
    %v1835 = vunpack.c.l.s4 1934713408
    %v1836 = vunpack.c.0.s8 %v1835
    %v1837 = vlaneseq
    %v1838 = vshrl.u32 %v1837, 7
    %v1839 = vsub.s32 %v1836, %v1838
    %v1840 = vrot.slane %v1832, %v1839
    %v1842 = vunpack.c.l.s4 1934713408
    %v1843 = vunpack.c.0.s8 %v1842
    %v1844 = vlaneseq
    %v1845 = vshrl.u32 %v1844, 7
    %v1846 = vsub.s32 %v1843, %v1845
    %v1847 = vrot.slane %v1833, %v1846
    %v1848 = vcombine.low %v1792, %v1824
    %v1849 = vcombine.high %v1792, %v1824
    %v1850 = vcombine.low %v1799, %v1831
    %v1851 = vcombine.high %v1799, %v1831
    %v1852 = vcombine.low %v1808, %v1840
    %v1853 = vcombine.high %v1808, %v1840
    %v1854 = vcombine.low %v1815, %v1847
    %v1855 = vcombine.high %v1815, %v1847
    %v1856 = vcombine.low %v1712, %v1714
    %v1857 = vcombine.high %v1712, %v1714
    %v1859 = vunpack.c.l.s4 1983009808
    %v1860 = vunpack.c.0.s8 %v1859
    %v1861 = vlaneseq
    %v1862 = vshrl.u32 %v1861, 7
    %v1863 = vsub.s32 %v1860, %v1862
    %v1864 = vrot.slane %v1856, %v1863
    %v1866 = vunpack.c.l.s4 1983009808
    %v1867 = vunpack.c.0.s8 %v1866
    %v1868 = vlaneseq
    %v1869 = vshrl.u32 %v1868, 7
    %v1870 = vsub.s32 %v1867, %v1869
    %v1871 = vrot.slane %v1857, %v1870
    %v1872 = vcombine.low %v1713, %v1715
    %v1873 = vcombine.high %v1713, %v1715
    %v1875 = vunpack.c.l.s4 1983009808
    %v1876 = vunpack.c.0.s8 %v1875
    %v1877 = vlaneseq
    %v1878 = vshrl.u32 %v1877, 7
    %v1879 = vsub.s32 %v1876, %v1878
    %v1880 = vrot.slane %v1872, %v1879
    %v1882 = vunpack.c.l.s4 1983009808
    %v1883 = vunpack.c.0.s8 %v1882
    %v1884 = vlaneseq
    %v1885 = vshrl.u32 %v1884, 7
    %v1886 = vsub.s32 %v1883, %v1885
    %v1887 = vrot.slane %v1873, %v1886
    %v1888 = vcombine.low %v1716, %v1718
    %v1889 = vcombine.high %v1716, %v1718
    %v1891 = vunpack.c.l.s4 1983009808
    %v1892 = vunpack.c.0.s8 %v1891
    %v1893 = vlaneseq
    %v1894 = vshrl.u32 %v1893, 7
    %v1895 = vsub.s32 %v1892, %v1894
    %v1896 = vrot.slane %v1888, %v1895
    %v1898 = vunpack.c.l.s4 1983009808
    %v1899 = vunpack.c.0.s8 %v1898
    %v1900 = vlaneseq
    %v1901 = vshrl.u32 %v1900, 7
    %v1902 = vsub.s32 %v1899, %v1901
    %v1903 = vrot.slane %v1889, %v1902
    %v1904 = vcombine.low %v1717, %v1719
    %v1905 = vcombine.high %v1717, %v1719
    %v1907 = vunpack.c.l.s4 1983009808
    %v1908 = vunpack.c.0.s8 %v1907
    %v1909 = vlaneseq
    %v1910 = vshrl.u32 %v1909, 7
    %v1911 = vsub.s32 %v1908, %v1910
    %v1912 = vrot.slane %v1904, %v1911
    %v1914 = vunpack.c.l.s4 1983009808
    %v1915 = vunpack.c.0.s8 %v1914
    %v1916 = vlaneseq
    %v1917 = vshrl.u32 %v1916, 7
    %v1918 = vsub.s32 %v1915, %v1917
    %v1919 = vrot.slane %v1905, %v1918
    %v1920 = vcombine.low %v1864, %v1880
    %v1921 = vcombine.high %v1864, %v1880
    %v1923 = vunpack.c.l.s4 1934713408
    %v1924 = vunpack.c.0.s8 %v1923
    %v1925 = vlaneseq
    %v1926 = vshrl.u32 %v1925, 7
    %v1927 = vsub.s32 %v1924, %v1926
    %v1928 = vrot.slane %v1920, %v1927
    %v1930 = vunpack.c.l.s4 1934713408
    %v1931 = vunpack.c.0.s8 %v1930
    %v1932 = vlaneseq
    %v1933 = vshrl.u32 %v1932, 7
    %v1934 = vsub.s32 %v1931, %v1933
    %v1935 = vrot.slane %v1921, %v1934
    %v1936 = vcombine.low %v1871, %v1887
    %v1937 = vcombine.high %v1871, %v1887
    %v1939 = vunpack.c.l.s4 1934713408
    %v1940 = vunpack.c.0.s8 %v1939
    %v1941 = vlaneseq
    %v1942 = vshrl.u32 %v1941, 7
    %v1943 = vsub.s32 %v1940, %v1942
    %v1944 = vrot.slane %v1936, %v1943
    %v1946 = vunpack.c.l.s4 1934713408
    %v1947 = vunpack.c.0.s8 %v1946
    %v1948 = vlaneseq
    %v1949 = vshrl.u32 %v1948, 7
    %v1950 = vsub.s32 %v1947, %v1949
    %v1951 = vrot.slane %v1937, %v1950
    %v1952 = vcombine.low %v1896, %v1912
    %v1953 = vcombine.high %v1896, %v1912
    %v1955 = vunpack.c.l.s4 1934713408
    %v1956 = vunpack.c.0.s8 %v1955
    %v1957 = vlaneseq
    %v1958 = vshrl.u32 %v1957, 7
    %v1959 = vsub.s32 %v1956, %v1958
    %v1960 = vrot.slane %v1952, %v1959
    %v1962 = vunpack.c.l.s4 1934713408
    %v1963 = vunpack.c.0.s8 %v1962
    %v1964 = vlaneseq
    %v1965 = vshrl.u32 %v1964, 7
    %v1966 = vsub.s32 %v1963, %v1965
    %v1967 = vrot.slane %v1953, %v1966
    %v1968 = vcombine.low %v1903, %v1919
    %v1969 = vcombine.high %v1903, %v1919
    %v1971 = vunpack.c.l.s4 1934713408
    %v1972 = vunpack.c.0.s8 %v1971
    %v1973 = vlaneseq
    %v1974 = vshrl.u32 %v1973, 7
    %v1975 = vsub.s32 %v1972, %v1974
    %v1976 = vrot.slane %v1968, %v1975
    %v1978 = vunpack.c.l.s4 1934713408
    %v1979 = vunpack.c.0.s8 %v1978
    %v1980 = vlaneseq
    %v1981 = vshrl.u32 %v1980, 7
    %v1982 = vsub.s32 %v1979, %v1981
    %v1983 = vrot.slane %v1969, %v1982
    %v1984 = vcombine.low %v1928, %v1960
    %v1985 = vcombine.high %v1928, %v1960
    %v1986 = vcombine.low %v1935, %v1967
    %v1987 = vcombine.high %v1935, %v1967
    %v1988 = vcombine.low %v1944, %v1976
    %v1989 = vcombine.high %v1944, %v1976
    %v1990 = vcombine.low %v1951, %v1983
    %v1991 = vcombine.high %v1951, %v1983
    %1993 = vrot.lane.b32.xlu0 %v1849, 8
    %v1994 = vpop.permute.xlu0 %1993
    %1997 = vrot.lane.b32.xlu0 %v1850, 16
    %v1998 = vpop.permute.xlu0 %1997
    %2001 = vrot.lane.b32.xlu0 %v1851, 24
    %v2002 = vpop.permute.xlu0 %2001
    %2005 = vrot.lane.b32.xlu0 %v1852, 32
    %v2006 = vpop.permute.xlu0 %2005
    %2009 = vrot.lane.b32.xlu0 %v1853, 40
    %v2010 = vpop.permute.xlu0 %2009
    %2013 = vrot.lane.b32.xlu0 %v1854, 48
    %v2014 = vpop.permute.xlu0 %2013
    %2017 = vrot.lane.b32.xlu0 %v1855, 56
    %v2018 = vpop.permute.xlu0 %2017
    %2021 = vrot.lane.b32.xlu0 %v1984, 64
    %v2022 = vpop.permute.xlu0 %2021
    %2025 = vrot.lane.b32.xlu0 %v1985, 72
    %v2026 = vpop.permute.xlu0 %2025
    %2029 = vrot.lane.b32.xlu0 %v1986, 80
    %v2030 = vpop.permute.xlu0 %2029
    %2033 = vrot.lane.b32.xlu0 %v1987, 88
    %v2034 = vpop.permute.xlu0 %2033
    %2037 = vrot.lane.b32.xlu0 %v1988, 96
    %v2038 = vpop.permute.xlu0 %2037
    %2041 = vrot.lane.b32.xlu0 %v1989, 104
    %v2042 = vpop.permute.xlu0 %2041
    %2045 = vrot.lane.b32.xlu0 %v1990, 112
    %v2046 = vpop.permute.xlu0 %2045
    %2049 = vrot.lane.b32.xlu0 %v1991, 120
    %v2050 = vpop.permute.xlu0 %2049
    %vm2052 = vcmask 64512
    %v2053 = vsel %vm2052, %v1848, %v1994
    %vm2054 = vcmask 130048
    %v2055 = vsel %vm2054, %v2053, %v1998
    %vm2056 = vcmask 195584
    %v2057 = vsel %vm2056, %v2055, %v2002
    %v2058 = vsel %vm55, %v2057, %v2006
    %vm2059 = vcmask 326656
    %v2060 = vsel %vm2059, %v2058, %v2010
    %vm2061 = vcmask 392192
    %v2062 = vsel %vm2061, %v2060, %v2014
    %vm2063 = vcmask 457728
    %v2064 = vsel %vm2063, %v2062, %v2018
    %vm2065 = vcmask 523264
    %v2066 = vsel %vm2065, %v2064, %v2022
    %vm2067 = vcmask 588800
    %v2068 = vsel %vm2067, %v2066, %v2026
    %vm2069 = vcmask 654336
    %v2070 = vsel %vm2069, %v2068, %v2030
    %vm2071 = vcmask 719872
    %v2072 = vsel %vm2071, %v2070, %v2034
    %vm2073 = vcmask 785408
    %v2074 = vsel %vm2073, %v2072, %v2038
    %vm2075 = vcmask 850944
    %v2076 = vsel %vm2075, %v2074, %v2042
    %vm2077 = vcmask 916480
    %v2078 = vsel %vm2077, %v2076, %v2046
    %vm2079 = vcmask 982016
    %v2080 = vsel %vm2079, %v2078, %v2050
    %2081 = vst [vmem:[#allocation5] sm:$0xff] %v2080
    // Predicated region
    $region10: #{tpu_custom_call.1} parent=1 // pred_check
      _
    $region11: #{tpu_custom_call.1} parent=1 // pred_check_branch
      %2083 = sbr.rel (0) target = $region13
    $region12: #{tpu_custom_call.1} parent=1 // pred_region
      %s2085 = ssub.s32 128, 128
      %2086 = vsyncadd [#allocation4], %s2085
      %s2088 = sshll.u32 [#allocation5], 4
      %s2089 = int_to_ptr.vmem [resolvable:$true] %s2088
      %2091 = dma.vmem_to_hbm [thread:$0]  %s2089, 128, %s1, [#allocation4]
    $region13: #{tpu_custom_call.1} parent=1 // pred_fallthru
      _
    // Predicated region
    $region14: #{tpu_custom_call.1} parent=1 // pred_check
      _
    $region15: #{tpu_custom_call.1} parent=1 // pred_check_branch
      %2093 = sbr.rel (0) target = $region17
    $region16: #{tpu_custom_call.1} parent=1 // pred_region
      %2094 = dma.done [#allocation4], 128
    $region17: #{tpu_custom_call.1} parent=1 // pred_fallthru
      _
    %2095 = vsyncpa [#allocation3], 1
    %2096 = vsyncpa [#allocation4], 1

</llo_original>
